<compile_context>
chip_gen: v7x
topology: tpu7x:2x2x1
jax: 0.10.0
libtpu: 0.0.40
codegen_flags: <defaults>
</compile_context>

<pallas_src>
import functools
import numpy as np

import jax
import jax.numpy as jnp
from jax import lax
from jax.experimental import pallas as pl
from jax.experimental.pallas import tpu as pltpu

BN_EPS = 1e-5                     # PyTorch BatchNorm2d default
ACT_DTYPE = jnp.bfloat16          # inter-layer activations / matmul operands
VMEM_LIMIT = 32 * 1024 * 1024     # conservative: safe on v5e / v6e / v7x


def _round_up(x, m):
    return (x + m - 1) // m * m


# ------------------------- tile selection helpers -------------------------

def _tile_m(M):
    if M <= 512:
        m = _round_up(M, 16)
        return m, m
    return 512, _round_up(M, 512)


def _tile_k(K):
    """TK = multiple of 128 that divides round_up(K,128) exactly (<= 2048)."""
    kp = _round_up(K, 128)
    if kp <= 2048:
        return kp, kp
    k128 = kp // 128
    d = max(d for d in range(1, 17) if k128 % d == 0)
    return 128 * d, kp


def _tile_n(cout):
    npad = _round_up(cout, 128)
    if npad >= 512:
        return 512, _round_up(cout, 512)
    if npad >= 256:
        return 256, _round_up(cout, 256)
    return 128, npad


def _pad2d(a, rows, cols):
    r, c = rows - a.shape[0], cols - a.shape[1]
    if r == 0 and c == 0:
        return a
    return jnp.pad(a, ((0, r), (0, c)))


# ------------------------------ Pallas kernels -----------------------------

def _gemm_kernel(*refs, bn):
    """Grid = (M_tiles, N_tiles, K_tiles); K innermost (accumulation).
    bn=True : epilogue writes bf16 raw conv result + per-M-tile (sum, sum_sq).
    bn=False: epilogue adds bias, writes f32."""
    if bn:
        x_ref, w_ref, raw_ref, st_ref, acc_ref = refs
    else:
        x_ref, w_ref, b_ref, o_ref, acc_ref = refs

    k = pl.program_id(2)

    @pl.when(k == 0)
    def _():
        acc_ref[...] = jnp.zeros_like(acc_ref)

    acc_ref[...] += jnp.dot(x_ref[...], w_ref[...],
                            preferred_element_type=jnp.float32)

    @pl.when(k == pl.num_programs(2) - 1)
    def _():
        acc = acc_ref[...]
        if bn:
            raw_ref[...] = acc.astype(raw_ref.dtype)
            # Padded patch rows are exactly zero (BN convs have no bias) ->
            # contribute 0 to both sums; divide by the true M outside.
            s1 = jnp.sum(acc, axis=0, keepdims=True)
            s2 = jnp.sum(acc * acc, axis=0, keepdims=True)
            st_ref[...] = jnp.concatenate([s1, s2], axis=0).reshape(
                1, 2, s1.shape[-1])
        else:
            o_ref[...] = (acc + b_ref[...]).astype(o_ref.dtype)


@functools.lru_cache(maxsize=None)
def _build_gemm(mp, kp, npad, tm, tk, tn, bn, out_dtype):
    gm, gn, gk = mp // tm, npad // tn, kp // tk
    kernel = functools.partial(_gemm_kernel, bn=bn)
    in_specs = [pl.BlockSpec((tm, tk), lambda i, j, k: (i, k)),
                pl.BlockSpec((tk, tn), lambda i, j, k: (k, j))]
    if bn:
        out_shape = (jax.ShapeDtypeStruct((mp, npad), out_dtype),
                     jax.ShapeDtypeStruct((gm, 2, npad), jnp.float32))
        out_specs = (pl.BlockSpec((tm, tn), lambda i, j, k: (i, j)),
                     pl.BlockSpec((1, 2, tn), lambda i, j, k: (i, 0, j)))
    else:
        in_specs.append(pl.BlockSpec((1, tn), lambda i, j, k: (0, j)))  # bias
        out_shape = jax.ShapeDtypeStruct((mp, npad), out_dtype)
        out_specs = pl.BlockSpec((tm, tn), lambda i, j, k: (i, j))
    return pl.pallas_call(
        kernel,
        out_shape=out_shape,
        grid_spec=pltpu.PrefetchScalarGridSpec(
            num_scalar_prefetch=0,
            grid=(gm, gn, gk),
            in_specs=in_specs,
            out_specs=out_specs,
            scratch_shapes=[pltpu.VMEM((tm, tn), jnp.float32)]),
        compiler_params=pltpu.CompilerParams(
            dimension_semantics=("parallel", "parallel", "arbitrary"),
            vmem_limit_bytes=VMEM_LIMIT))


def _bn_apply_kernel(*refs, relu, has_res):
    """out = maybe_relu(raw*scale + shift [+ residual]); f32 math in-register."""
    if has_res:
        y_ref, sc_ref, sh_ref, r_ref, o_ref = refs
    else:
        y_ref, sc_ref, sh_ref, o_ref = refs
        r_ref = None
    y = y_ref[...].astype(jnp.float32) * sc_ref[...] + sh_ref[...]
    if has_res:
        y = y + r_ref[...].astype(jnp.float32)
    if relu:
        y = jnp.maximum(y, 0.0)
    o_ref[...] = y.astype(o_ref.dtype)


@functools.lru_cache(maxsize=None)
def _build_bn_apply(mp, npad, tm, tn, relu, has_res, out_dtype):
    kernel = functools.partial(_bn_apply_kernel, relu=relu, has_res=has_res)
    in_specs = [pl.BlockSpec((tm, tn), lambda i, j: (i, j)),
                pl.BlockSpec((1, tn), lambda i, j: (0, j)),
                pl.BlockSpec((1, tn), lambda i, j: (0, j))]
    if has_res:
        in_specs.append(pl.BlockSpec((tm, tn), lambda i, j: (i, j)))
    return pl.pallas_call(
        kernel,
        out_shape=jax.ShapeDtypeStruct((mp, npad), out_dtype),
        grid_spec=pltpu.PrefetchScalarGridSpec(
            num_scalar_prefetch=0,
            grid=(mp // tm, npad // tn),
            in_specs=in_specs,
            out_specs=pl.BlockSpec((tm, tn), lambda i, j: (i, j))),
        compiler_params=pltpu.CompilerParams(
            dimension_semantics=("parallel", "parallel"),
            vmem_limit_bytes=VMEM_LIMIT))


def _maxpool_kernel(a_ref, b_ref, c_ref, o_ref):
    o_ref[...] = jnp.maximum(jnp.maximum(a_ref[...], b_ref[...]), c_ref[...])


@functools.lru_cache(maxsize=None)
def _build_maxpool(mp, C, tm, dtype):
    return pl.pallas_call(
        _maxpool_kernel,
        out_shape=jax.ShapeDtypeStruct((mp, C), dtype),
        grid_spec=pltpu.PrefetchScalarGridSpec(
            num_scalar_prefetch=0,
            grid=(mp // tm,),
            in_specs=[pl.BlockSpec((tm, C), lambda i: (i, 0))
                      for _ in range(3)],
            out_specs=pl.BlockSpec((tm, C), lambda i: (i, 0))),
        compiler_params=pltpu.CompilerParams(
            dimension_semantics=("parallel",),
            vmem_limit_bytes=VMEM_LIMIT))


# -------------------------- conv / pool wrappers ---------------------------

def _im2col(x, kh, kw, stride, padding, dilation):
    """x: (B,H,W,C) -> ((B*Ho*Wo, kh*kw*C), Ho, Wo); feature order (kh,kw,C).
    1x1 convs skip patch materialization entirely (reshape / strided view)."""
    B, H, W, C = x.shape
    Ho = (H + 2 * padding - dilation * (kh - 1) - 1) // stride + 1
    Wo = (W + 2 * padding - dilation * (kw - 1) - 1) // stride + 1
    if kh == 1 and kw == 1 and padding == 0:
        if stride == 1:
            return x.reshape(B * H * W, C), Ho, Wo
        sl = lax.slice(x, (0, 0, 0, 0),
                       (B, (Ho - 1) * stride + 1, (Wo - 1) * stride + 1, C),
                       (1, stride, stride, 1))
        return sl.reshape(B * Ho * Wo, C), Ho, Wo
    xp = jnp.pad(x, ((0, 0), (padding, padding), (padding, padding), (0, 0)))
    cols = []
    for i in range(kh):
        for j in range(kw):
            h0, w0 = i * dilation, j * dilation
            sl = lax.slice(xp, (0, h0, w0, 0),
                           (B, h0 + (Ho - 1) * stride + 1,
                            w0 + (Wo - 1) * stride + 1, C),
                           (1, stride, stride, 1))
            cols.append(sl)
    patches = jnp.concatenate(cols, axis=-1)            # (B,Ho,Wo,kh*kw*C)
    return patches.reshape(B * Ho * Wo, kh * kw * C), Ho, Wo


@functools.partial(jax.jit, static_argnames=("kh", "kw", "cout", "stride",
                                             "padding", "dilation", "relu"))
def _conv_bn_jit(x, wp, gamma, beta, residual, *, kh, kw, cout,
                 stride, padding, dilation, relu):
    """conv (bf16 MXU) + train-mode BatchNorm (+ residual) (+ ReLU), NHWC."""
    B = x.shape[0]
    patches, Ho, Wo = _im2col(x, kh, kw, stride, padding, dilation)
    M, K = patches.shape
    tk, kp = _tile_k(K)
    tn, npad = _tile_n(cout)
    tm, mp = _tile_m(M)
    assert (kp, npad) == wp.shape
    xp = _pad2d(patches.astype(ACT_DTYPE), mp, kp)

    raw, stats = _build_gemm(mp, kp, npad, tm, tk, tn, True, ACT_DTYPE)(xp, wp)

    # Batch statistics over the M = N*H*W valid rows (f32 partial sums).
    s = jnp.sum(stats, axis=0)                      # (2, npad)
    mean = s[0] / M
    var = jnp.maximum(s[1] / M - mean * mean, 0.0)
    # TODO(synk): use a shifted/two-pass variance if E[x^2]-E[x]^2
    # cancellation ever becomes an accuracy issue with pretrained weights.
    inv_std = lax.rsqrt(var + BN_EPS)
    gpad = jnp.pad(gamma, (0, npad - cout))
    bpad = jnp.pad(beta, (0, npad - cout))
    scale = (gpad * inv_std).reshape(1, npad)
    shift = (bpad - mean * gpad * inv_std).reshape(1, npad)

    has_res = residual is not None
    bn_tn = npad if npad <= 1024 else (1024 if npad % 1024 == 0 else tn)
    args = [raw, scale, shift]
    if has_res:
        args.append(_pad2d(residual.reshape(-1, cout).astype(ACT_DTYPE),
                           mp, npad))
    act = _build_bn_apply(mp, npad, tm, bn_tn, relu, has_res, ACT_DTYPE)(*args)
    return act[:M, :cout].reshape(B, Ho, Wo, cout)


def conv_bn(x, prep, gamma, beta, *, stride=1, padding=0, dilation=1,
            relu=False, residual=None):
    return _conv_bn_jit(x, prep["wp"], gamma, beta, residual,
                        kh=prep["kh"], kw=prep["kw"], cout=prep["cout"],
                        stride=stride, padding=padding, dilation=dilation,
                        relu=relu)


@functools.partial(jax.jit, static_argnames=("cout", "dilations"))
def _classifier_jit(x, wp, bias_pad, *, cout, dilations):
    """All 4 dilated 3x3 classifier heads as ONE long-K GEMM (+summed bias)."""
    B, H, W, _ = x.shape
    cols = [_im2col(x, 3, 3, 1, d, d)[0] for d in dilations]
    patches = jnp.concatenate(cols, axis=-1)            # (M, 4*9*Cin)
    M, K = patches.shape
    tk, kp = _tile_k(K)
    tn, npad = _tile_n(cout)
    tm, mp = _tile_m(M)
    assert (kp, npad) == wp.shape
    xp = _pad2d(patches.astype(ACT_DTYPE), mp, kp)
    out = _build_gemm(mp, kp, npad, tm, tk, tn, False, jnp.float32)(
        xp, wp, bias_pad)
    return out[:M, :cout].reshape(B, H, W, cout)


@jax.jit
def maxpool2d_3x3_s2_p1_ceil(x):
    """nn.MaxPool2d(kernel_size=3, stride=2, padding=1, ceil_mode=True), NHWC."""
    B, H, W, C = x.shape
    k, s, p = 3, 2, 1

    def out_size(n):
        o = -(-(n + 2 * p - k) // s) + 1
        if (o - 1) * s >= n + p:         # PyTorch ceil_mode rule
            o -= 1
        return o

    Ho, Wo = out_size(H), out_size(W)
    ph = max((Ho - 1) * s + k - H - p, 0)
    pw = max((Wo - 1) * s + k - W - p, 0)
    xp = jnp.pad(x, ((0, 0), (p, ph), (p, pw), (0, 0)),
                 constant_values=-jnp.inf)
    Hp = H + p + ph
    # kw (width) 3-way max folded in a single fused JAX pass.
    wmax = None
    for dj in range(k):
        sl = lax.slice(xp, (0, 0, dj, 0),
                       (B, Hp, dj + (Wo - 1) * s + 1, C), (1, 1, s, 1))
        wmax = sl if wmax is None else jnp.maximum(wmax, sl)
    M = B * Ho * Wo
    tm = min(1024, _round_up(M, 16))
    mp = _round_up(M, tm)
    views = []
    for di in range(k):
        sl = lax.slice(wmax, (0, di, 0, 0),
                       (B, di + (Ho - 1) * s + 1, Wo, C), (1, s, 1, 1))
        sl = sl.reshape(M, C)
        if mp != M:
            sl = jnp.pad(sl, ((0, mp - M), (0, 0)))
        views.append(sl)
    out = _build_maxpool(mp, C, tm, x.dtype)(*views)
    return out[:M].reshape(B, Ho, Wo, C)


# ------------------ deterministic parameter initialization -----------------

def _prep_conv(w_oihw):
    """OIHW f32 weight -> padded (Kp, Np) bf16 matmul matrix (done once)."""
    cout, cin, kh, kw = w_oihw.shape
    K = kh * kw * cin
    _, kp = _tile_k(K)
    _, npad = _tile_n(cout)
    wm = np.transpose(w_oihw, (2, 3, 1, 0)).reshape(K, cout)
    wp = np.zeros((kp, npad), np.float32)
    wp[:K, :cout] = wm
    return {"wp": jnp.asarray(wp, dtype=ACT_DTYPE),
            "kh": kh, "kw": kw, "cout": cout}


class _ParamInit:
    def __init__(self, seed=0):
        self.rng = np.random.RandomState(seed)

    def conv(self, cout, cin, kh, kw):
        w = self.rng.normal(0.0, 0.01, (cout, cin, kh, kw)).astype(np.float32)
        return _prep_conv(w)

    def bn(self, c):
        gamma = jnp.asarray(
            (1.0 + 0.1 * self.rng.normal(size=c)).astype(np.float32))
        beta = jnp.asarray((0.1 * self.rng.normal(size=c)).astype(np.float32))
        return gamma, beta


def _init_bottleneck(pi, inplanes, planes, stride, dilation, has_down):
    p = {"conv1": pi.conv(planes, inplanes, 1, 1), "bn1": pi.bn(planes),
         "conv2": pi.conv(planes, planes, 3, 3), "bn2": pi.bn(planes),
         "conv3": pi.conv(planes * 4, planes, 1, 1), "bn3": pi.bn(planes * 4),
         "stride": stride, "dilation": dilation}
    if has_down:
        p["down_conv"] = pi.conv(planes * 4, inplanes, 1, 1)
        p["down_bn"] = pi.bn(planes * 4)
    return p


def _init_layer(pi, inplanes, planes, blocks, stride=1, dilation=1):
    has_down = (stride != 1 or inplanes != planes * 4
                or dilation == 2 or dilation == 4)
    layer = [_init_bottleneck(pi, inplanes, planes, stride, dilation, has_down)]
    inplanes = planes * 4
    for _ in range(1, blocks):
        layer.append(_init_bottleneck(pi, inplanes, planes, 1, dilation, False))
    return layer, inplanes


def _init_classifier(pi, inplanes, dilations, num_classes):
    """Classifier_Module = sum of 4 dilated 3x3 convs (each with bias).
    Fused at init time: weights stacked along K, biases pre-summed."""
    mats, bias_sum = [], np.zeros((num_classes,), np.float32)
    for _ in dilations:
        w = pi.rng.normal(0.0, 0.01,
                          (num_classes, inplanes, 3, 3)).astype(np.float32)
        b = (0.01 * pi.rng.normal(size=num_classes)).astype(np.float32)
        mats.append(np.transpose(w, (2, 3, 1, 0)).reshape(9 * inplanes,
                                                          num_classes))
        bias_sum += b
    K = len(dilations) * 9 * inplanes
    _, kp = _tile_k(K)
    _, npad = _tile_n(num_classes)
    wp = np.zeros((kp, npad), np.float32)
    wp[:K, :num_classes] = np.concatenate(mats, axis=0)
    bpad = np.zeros((1, npad), np.float32)
    bpad[0, :num_classes] = bias_sum
    return {"wp": jnp.asarray(wp, ACT_DTYPE), "bias": jnp.asarray(bpad),
            "cout": num_classes, "dilations": tuple(dilations)}


def init_shared_encoder_var(seed=0, n_classes=19):
    pi = _ParamInit(seed)
    params = {"conv1": pi.conv(64, 3, 7, 7), "bn1": pi.bn(64)}
    inplanes = 64
    params["layer1"], inplanes = _init_layer(pi, inplanes, 64, 3)
    params["layer2"], inplanes = _init_layer(pi, inplanes, 128, 4, stride=2)
    params["layer3"], inplanes = _init_layer(pi, inplanes, 256, 23, dilation=2)
    params["layer4"], inplanes = _init_layer(pi, inplanes, 512, 3, dilation=4)
    params["final1"] = _init_classifier(pi, 1024, [6, 12, 18, 24], n_classes)
    params["final2"] = _init_classifier(pi, 2048, [6, 12, 18, 24], n_classes)
    return params


# ------------------ forward pass (mirrors SharedEncoder_var) ----------------

def _bottleneck_forward(p, x):
    out = conv_bn(x, p["conv1"], *p["bn1"], stride=p["stride"], relu=True)
    out = conv_bn(out, p["conv2"], *p["bn2"], padding=p["dilation"],
                  dilation=p["dilation"], relu=True)
    if "down_conv" in p:
        residual = conv_bn(x, p["down_conv"], *p["down_bn"],
                           stride=p["stride"], relu=False)
    else:
        residual = x
    return conv_bn(out, p["conv3"], *p["bn3"], residual=residual, relu=True)


def _classifier_forward(head, x):
    return _classifier_jit(x, head["wp"], head["bias"],
                           cout=head["cout"], dilations=head["dilations"])


def shared_encoder_var_forward(params, x_nchw):
    x = jnp.transpose(x_nchw, (0, 2, 3, 1)).astype(ACT_DTYPE)  # NCHW -> NHWC
    # layer0: conv7x7/2 + BN + ReLU + maxpool3x3/2 (ceil_mode)
    x = conv_bn(x, params["conv1"], *params["bn1"],
                stride=2, padding=3, relu=True)
    x = maxpool2d_3x3_s2_p1_ceil(x)
    for blk in params["layer1"]:
        x = _bottleneck_forward(blk, x)
    for blk in params["layer2"]:
        x = _bottleneck_forward(blk, x)
    for blk in params["layer3"]:
        x = _bottleneck_forward(blk, x)
    x1 = _classifier_forward(params["final1"], x)      # final1(layer3 out)
    x2 = x
    for blk in params["layer4"]:
        x2 = _bottleneck_forward(blk, x2)
    x2 = _classifier_forward(params["final2"], x2)     # final2(layer4 out)
    # NHWC -> NCHW to match the PyTorch output convention
    return jnp.transpose(x1, (0, 3, 1, 2)), jnp.transpose(x2, (0, 3, 1, 2))


if __name__ == "__main__":
    params = init_shared_encoder_var(seed=0, n_classes=19)
    # Small input consistent with the module: NCHW, 3 input channels.
    x = jax.random.normal(jax.random.PRNGKey(0), (2, 3, 33, 33),
                          dtype=jnp.float32)
    x1, x2 = shared_encoder_var_forward(params, x)
    x1, x2 = jax.block_until_ready((x1, x2))
    assert x1.shape == (2, 19, 5, 5), x1.shape
    assert x2.shape == (2, 19, 5, 5), x2.shape
    assert bool(jnp.isfinite(x1).all()) and bool(jnp.isfinite(x2).all())
    print("KERNEL_OK")
</pallas_src>

<mosaic_0001>
module attributes {stable_mosaic.version = 11 : i64} {
  func.func @_gemm_kernel(%arg0: i32, %arg1: i32, %arg2: i32, %arg3: memref<512x256xbf16, #tpu.memory_space<vmem>>, %arg4: memref<256x128xbf16, #tpu.memory_space<vmem>>, %arg5: memref<512x128xbf16, #tpu.memory_space<vmem>>, %arg6: memref<1x2x128xf32, #tpu.memory_space<vmem>>, %arg7: memref<512x128xf32, #tpu.memory_space<vmem>>) attributes {dimension_semantics = [#tpu.dimension_semantics<parallel>, #tpu.dimension_semantics<parallel>, #tpu.dimension_semantics<arbitrary>], iteration_bounds = array<i64: 2, 1, 1>, scalar_prefetch = 0 : i64, scratch_operands = 1 : i64, tpu.core_type = #tpu.core_type<tc>, window_params = [{transform_indices = @transform_0, window_bounds = array<i64: 512, 256>}, {transform_indices = @transform_1, window_bounds = array<i64: 256, 128>}, {transform_indices = @transform_2, window_bounds = array<i64: 512, 128>}, {transform_indices = @transform_3, window_bounds = array<i64: 1, 2, 128>}]} {
    %c0_i32 = arith.constant 0 : i32
    %0 = arith.cmpi eq, %arg2, %c0_i32 : i32
    %1 = arith.extui %0 : i1 to i32
    %c0_i32_0 = arith.constant 0 : i32
    %2 = arith.cmpi ne, %1, %c0_i32_0 : i32
    scf.if %2 {
      %cst_10 = arith.constant 0.000000e+00 : f32
      %12 = vector.broadcast %cst_10 : f32 to vector<512x128xf32>
      %c0_11 = arith.constant 0 : index
      %c0_12 = arith.constant 0 : index
      %13 = vector.load %arg7[%c0_11, %c0_12] : memref<512x128xf32, #tpu.memory_space<vmem>>, vector<512x128xf32>
      tpu.vector_store %arg7[%c0_11, %c0_12], %12 {strides = array<i32>} : memref<512x128xf32, #tpu.memory_space<vmem>>, vector<512x128xf32>,
    } else {
    }
    %c0 = arith.constant 0 : index
    %c0_1 = arith.constant 0 : index
    %3 = vector.load %arg7[%c0, %c0_1] : memref<512x128xf32, #tpu.memory_space<vmem>>, vector<512x128xf32>
    %c0_2 = arith.constant 0 : index
    %c0_3 = arith.constant 0 : index
    %4 = vector.load %arg3[%c0_2, %c0_3] : memref<512x256xbf16, #tpu.memory_space<vmem>>, vector<512x256xbf16>
    %c0_4 = arith.constant 0 : index
    %c0_5 = arith.constant 0 : index
    %5 = vector.load %arg4[%c0_4, %c0_5] : memref<256x128xbf16, #tpu.memory_space<vmem>>, vector<256x128xbf16>
    %cst = arith.constant dense<0.000000e+00> : vector<512x128xf32>
    %6 = tpu.matmul %4, %5, %cst {dimension_numbers = #tpu.dot_dimension_numbers<[1], [0], [0], [1], [0, 0, 1, 1], [], []>} : vector<512x256xbf16>, vector<256x128xbf16>, vector<512x128xf32> -> vector<512x128xf32>
    %7 = arith.addf %3, %6 : vector<512x128xf32>
    %c0_6 = arith.constant 0 : index
    %c0_7 = arith.constant 0 : index
    %8 = vector.load %arg7[%c0_6, %c0_7] : memref<512x128xf32, #tpu.memory_space<vmem>>, vector<512x128xf32>
    tpu.vector_store %arg7[%c0_6, %c0_7], %7 {strides = array<i32>} : memref<512x128xf32, #tpu.memory_space<vmem>>, vector<512x128xf32>,
    %c0_i32_8 = arith.constant 0 : i32
    %9 = arith.cmpi eq, %arg2, %c0_i32_8 : i32
    %10 = arith.extui %9 : i1 to i32
    %c0_i32_9 = arith.constant 0 : i32
    %11 = arith.cmpi ne, %10, %c0_i32_9 : i32
    scf.if %11 {
      %c0_10 = arith.constant 0 : index
      %c0_11 = arith.constant 0 : index
      %12 = vector.load %arg7[%c0_10, %c0_11] : memref<512x128xf32, #tpu.memory_space<vmem>>, vector<512x128xf32>
      %13 = arith.truncf %12 : vector<512x128xf32> to vector<512x128xbf16>
      %c0_12 = arith.constant 0 : index
      %c0_13 = arith.constant 0 : index
      %14 = vector.load %arg5[%c0_12, %c0_13] : memref<512x128xbf16, #tpu.memory_space<vmem>>, vector<512x128xbf16>
      tpu.vector_store %arg5[%c0_12, %c0_13], %13 {strides = array<i32>} : memref<512x128xbf16, #tpu.memory_space<vmem>>, vector<512x128xbf16>,
      %cst_14 = arith.constant dense<0.000000e+00> : vector<128xf32>
      %15 = vector.multi_reduction <add>, %12, %cst_14 [0] : vector<512x128xf32> to vector<128xf32>
      %16 = vector.shape_cast %15 : vector<128xf32> to vector<1x128xf32>
      %17 = arith.mulf %12, %12 : vector<512x128xf32>
      %cst_15 = arith.constant dense<0.000000e+00> : vector<128xf32>
      %18 = vector.multi_reduction <add>, %17, %cst_15 [0] : vector<512x128xf32> to vector<128xf32>
      %19 = vector.shape_cast %18 : vector<128xf32> to vector<1x128xf32>
      %20 = tpu.concatenate %16, %19 in 0 : vector<1x128xf32>, vector<1x128xf32> -> vector<2x128xf32>
      %21 = vector.shape_cast %20 : vector<2x128xf32> to vector<1x2x128xf32>
      %c0_16 = arith.constant 0 : index
      %c0_17 = arith.constant 0 : index
      %c0_18 = arith.constant 0 : index
      %22 = vector.load %arg6[%c0_16, %c0_17, %c0_18] : memref<1x2x128xf32, #tpu.memory_space<vmem>>, vector<1x2x128xf32>
      tpu.vector_store %arg6[%c0_16, %c0_17, %c0_18], %21 {strides = array<i32>} : memref<1x2x128xf32, #tpu.memory_space<vmem>>, vector<1x2x128xf32>,
    } else {
    }
    return
  }
  func.func @transform_0(%arg0: i32, %arg1: i32, %arg2: i32) -> (i32, i32) {
    %c0_i32 = arith.constant 0 : i32
    return %arg0, %arg2 : i32, i32
  }
  func.func @transform_1(%arg0: i32, %arg1: i32, %arg2: i32) -> (i32, i32) {
    %c0_i32 = arith.constant 0 : i32
    return %arg2, %arg1 : i32, i32
  }
  func.func @transform_2(%arg0: i32, %arg1: i32, %arg2: i32) -> (i32, i32) {
    %c0_i32 = arith.constant 0 : i32
    return %arg0, %arg1 : i32, i32
  }
  func.func @transform_3(%arg0: i32, %arg1: i32, %arg2: i32) -> (i32, i32, i32) {
    %c0_i32 = arith.constant 0 : i32
    %c0_i32_0 = arith.constant 0 : i32
    return %arg0, %c0_i32, %arg1 : i32, i32, i32
  }
}

module attributes {stable_mosaic.version = 11 : i64} {
  func.func @_bn_apply_kernel(%arg0: i32, %arg1: i32, %arg2: memref<512x128xbf16, #tpu.memory_space<vmem>>, %arg3: memref<1x128xf32, #tpu.memory_space<vmem>>, %arg4: memref<1x128xf32, #tpu.memory_space<vmem>>, %arg5: memref<512x128xbf16, #tpu.memory_space<vmem>>) attributes {dimension_semantics = [#tpu.dimension_semantics<parallel>, #tpu.dimension_semantics<parallel>], iteration_bounds = array<i64: 2, 1>, scalar_prefetch = 0 : i64, scratch_operands = 0 : i64, tpu.core_type = #tpu.core_type<tc>, window_params = [{transform_indices = @transform_0, window_bounds = array<i64: 512, 128>}, {transform_indices = @transform_1, window_bounds = array<i64: 1, 128>}, {transform_indices = @transform_2, window_bounds = array<i64: 1, 128>}, {transform_indices = @transform_3, window_bounds = array<i64: 512, 128>}]} {
    %c0 = arith.constant 0 : index
    %c0_0 = arith.constant 0 : index
    %0 = vector.load %arg2[%c0, %c0_0] : memref<512x128xbf16, #tpu.memory_space<vmem>>, vector<512x128xbf16>
    %1 = arith.extf %0 : vector<512x128xbf16> to vector<512x128xf32>
    %c0_1 = arith.constant 0 : index
    %c0_2 = arith.constant 0 : index
    %2 = vector.load %arg3[%c0_1, %c0_2] : memref<1x128xf32, #tpu.memory_space<vmem>>, vector<1x128xf32>
    %3 = vector.broadcast %2 : vector<1x128xf32> to vector<512x128xf32>
    %4 = arith.mulf %1, %3 : vector<512x128xf32>
    %c0_3 = arith.constant 0 : index
    %c0_4 = arith.constant 0 : index
    %5 = vector.load %arg4[%c0_3, %c0_4] : memref<1x128xf32, #tpu.memory_space<vmem>>, vector<1x128xf32>
    %6 = vector.broadcast %5 : vector<1x128xf32> to vector<512x128xf32>
    %7 = arith.addf %4, %6 : vector<512x128xf32>
    %cst = arith.constant 0.000000e+00 : f32
    %8 = vector.broadcast %cst : f32 to vector<512x128xf32>
    %9 = arith.maximumf %7, %8 : vector<512x128xf32>
    %10 = arith.truncf %9 : vector<512x128xf32> to vector<512x128xbf16>
    %c0_5 = arith.constant 0 : index
    %c0_6 = arith.constant 0 : index
    %11 = vector.load %arg5[%c0_5, %c0_6] : memref<512x128xbf16, #tpu.memory_space<vmem>>, vector<512x128xbf16>
    tpu.vector_store %arg5[%c0_5, %c0_6], %10 {strides = array<i32>} : memref<512x128xbf16, #tpu.memory_space<vmem>>, vector<512x128xbf16>,
    return
  }
  func.func @transform_0(%arg0: i32, %arg1: i32) -> (i32, i32) {
    %c0_i32 = arith.constant 0 : i32
    return %arg0, %arg1 : i32, i32
  }
  func.func @transform_1(%arg0: i32, %arg1: i32) -> (i32, i32) {
    %c0_i32 = arith.constant 0 : i32
    %c0_i32_0 = arith.constant 0 : i32
    return %c0_i32, %arg1 : i32, i32
  }
  func.func @transform_2(%arg0: i32, %arg1: i32) -> (i32, i32) {
    %c0_i32 = arith.constant 0 : i32
    %c0_i32_0 = arith.constant 0 : i32
    return %c0_i32, %arg1 : i32, i32
  }
  func.func @transform_3(%arg0: i32, %arg1: i32) -> (i32, i32) {
    %c0_i32 = arith.constant 0 : i32
    return %arg0, %arg1 : i32, i32
  }
}

</mosaic_0001>

<llo_original>
// kernel: _conv_bn_jit.2
$region0: #{_conv_bn_jit.2}
  #allocation0 [shape = 'u32[]', space=smem, size = 0x4, offset = 0x4, fixed_abs, tag = 'smem constant byte address 0x4 - core index']
  #allocation1 [shape = 'u32[144,128]{1,0:T(1,128)}', space=vmem, size = 0x12000, scoped, tag = 'internal scratch']
  #allocation2 [shape = 'f32[512,128]{1,0:T(8,128)}', space=vmem, size = 0x40000, scoped, tag = 'scratch operand']
  %s0 = inlined_call_operand.vmem [shape: bf16[1024,256], index: 0, kind: input, shape index: {}]
  %s1 = inlined_call_operand.vmem [shape: bf16[256,128], index: 1, kind: input, shape index: {}]
  %s2 = inlined_call_operand.vmem [shape: bf16[1024,128], index: 2, kind: output, shape index: {0}]
  %s3 = inlined_call_operand.vmem [shape: f32[2,2,128], index: 3, kind: output, shape index: {1}]
  %4 = xla_tuple %s2, %s3
  %s5 = sld [smem:[#allocation0]]
  $region57: #{_conv_bn_jit.2} parent=0
    _
  %s7 = ssub.s32 1, %s5
  %s8 = scalar_select 0, %s7, %s5
  loop: start=0, step=1, limit=4
  $region2: #{_conv_bn_jit.2} parent=0 // loop_pre_header
    _
  $region3: #{_conv_bn_jit.2} parent=0 // loop_header
    %s10 = sphi 0, %s14
    %p11 = scmp.ge.s32.totalorder %s10, 4
    %s17 = sphi 0, %s36
    %s18 = sphi 0, %s32
    %s19 = sphi 0, %s28
    %s20 = sphi 0, %s17
    %s21 = sphi 0, %s18
    %s22 = sphi 0, %s19
    %s23 = sphi 0, %s20
    %s24 = sphi 0, %s21
    %s25 = sphi 0, %s22
    %s41 = sphi 0, %s43
    %s44 = sphi 0, %s41
    %s45 = sphi 0, %s44
    %s61 = sphi 0, %s45
    %s69 = sphi 0, %s71
    %s72 = sphi 0, %s69
    %s73 = sphi 0, %s72
    %s89 = sphi 0, %s73
    %s97 = sphi 0, %s99
    %s100 = sphi 0, %s97
    %s101 = sphi 0, %s100
    %s117 = sphi 0, %s101
    %s125 = sphi 0, %s127
    %s128 = sphi 0, %s125
    %s129 = sphi 0, %s128
    %s145 = sphi 0, %s129
  $region4: #{_conv_bn_jit.2} parent=0 // loop_header_branch
    %13 = sbr.rel (%p11) target = $region8
  $region5: #{_conv_bn_jit.2} parent=0 // loop_body
    %s15 = ssub.s32 %s10, 1
    %s16 = ssub.s32 %s10, 2
    %s26 = sadd.s32 1, %s19
    %p27 = scmp.ge.s32.totalorder %s26, 1
    %s28 = scalar_select %p27, 0, %s26
    %s29 = sadd.s32 1, %s18
    %s30 = scalar_select %p27, %s29, %s18
    %p31 = scmp.ge.s32.totalorder %s30, 1
    %s32 = scalar_select %p31, 0, %s30
    %s33 = sadd.s32 1, %s17
    %s34 = scalar_select %p31, %s33, %s17
    %p35 = scmp.ge.s32.totalorder %s34, 2
    %s36 = scalar_select %p35, 0, %s34
    %s37 = ssub.s32 %s17, %s36
    %s38 = ssub.s32 %s19, %s28
    %s39 = sor.u32 %s37, %s38
    %p40 = scmp.eq.s32.totalorder %s39, 0
    %s42 = sadd.s32 %s41, 1
    %s43 = scalar_select %p40, %s41, %s42
    %p46 = pneg %p40
    %p47 = scmp.eq.s32.totalorder %s10, 1
    %p48 = por %p46, %p47
    %p49 = scmp.ne.s32.totalorder %s41, %s44
    %p50 = scmp.eq.s32.totalorder %s10, 0
    %p51 = por %p49, %p50
    %p52 = scmp.ne.s32.totalorder %s41, %s44
    %p53 = scmp.eq.s32.totalorder %s15, 1
    %p54 = por %p52, %p53
    %p55 = scmp.ne.s32.totalorder %s44, %s45
    %p56 = scmp.eq.s32.totalorder %s15, 0
    %p57 = por %p55, %p56
    %p58 = scmp.ne.s32.totalorder %s44, %s45
    %p59 = scmp.eq.s32.totalorder %s16, 1
    %p60 = por %p58, %p59
    %p62 = scmp.ne.s32.totalorder %s45, %s61
    %p63 = scmp.eq.s32.totalorder %s16, 0
    %p64 = por %p62, %p63
    %s65 = ssub.s32 %s19, %s28
    %s66 = ssub.s32 %s18, %s32
    %s67 = sor.u32 %s65, %s66
    %p68 = scmp.eq.s32.totalorder %s67, 0
    %s70 = sadd.s32 %s69, 1
    %s71 = scalar_select %p68, %s69, %s70
    %p74 = pneg %p68
    %p75 = scmp.eq.s32.totalorder %s10, 1
    %p76 = por %p74, %p75
    %p77 = scmp.ne.s32.totalorder %s69, %s72
    %p78 = scmp.eq.s32.totalorder %s10, 0
    %p79 = por %p77, %p78
    %p80 = scmp.ne.s32.totalorder %s69, %s72
    %p81 = scmp.eq.s32.totalorder %s15, 1
    %p82 = por %p80, %p81
    %p83 = scmp.ne.s32.totalorder %s72, %s73
    %p84 = scmp.eq.s32.totalorder %s15, 0
    %p85 = por %p83, %p84
    %p86 = scmp.ne.s32.totalorder %s72, %s73
    %p87 = scmp.eq.s32.totalorder %s16, 1
    %p88 = por %p86, %p87
    %p90 = scmp.ne.s32.totalorder %s73, %s89
    %p91 = scmp.eq.s32.totalorder %s16, 0
    %p92 = por %p90, %p91
    %s93 = ssub.s32 %s17, %s36
    %s94 = ssub.s32 %s18, %s32
    %s95 = sor.u32 %s93, %s94
    %p96 = scmp.eq.s32.totalorder %s95, 0
    %s98 = sadd.s32 %s97, 1
    %s99 = scalar_select %p96, %s97, %s98
    %p102 = pneg %p96
    %p103 = scmp.eq.s32.totalorder %s10, 1
    %p104 = por %p102, %p103
    %p105 = scmp.ne.s32.totalorder %s97, %s100
    %p106 = scmp.eq.s32.totalorder %s10, 0
    %p107 = por %p105, %p106
    %p108 = scmp.ne.s32.totalorder %s97, %s100
    %p109 = scmp.eq.s32.totalorder %s15, 1
    %p110 = por %p108, %p109
    %p111 = scmp.ne.s32.totalorder %s100, %s101
    %p112 = scmp.eq.s32.totalorder %s15, 0
    %p113 = por %p111, %p112
    %p114 = scmp.ne.s32.totalorder %s100, %s101
    %p115 = scmp.eq.s32.totalorder %s16, 1
    %p116 = por %p114, %p115
    %p118 = scmp.ne.s32.totalorder %s101, %s117
    %p119 = scmp.eq.s32.totalorder %s16, 0
    %p120 = por %p118, %p119
    %s121 = ssub.s32 %s17, %s36
    %s122 = ssub.s32 %s18, %s32
    %s123 = sor.u32 %s121, %s122
    %p124 = scmp.eq.s32.totalorder %s123, 0
    %s126 = sadd.s32 %s125, 1
    %s127 = scalar_select %p124, %s125, %s126
    %p130 = pneg %p124
    %p131 = scmp.eq.s32.totalorder %s10, 1
    %p132 = por %p130, %p131
    %p133 = scmp.ne.s32.totalorder %s125, %s128
    %p134 = scmp.eq.s32.totalorder %s10, 0
    %p135 = por %p133, %p134
    %p136 = scmp.ne.s32.totalorder %s125, %s128
    %p137 = scmp.eq.s32.totalorder %s15, 1
    %p138 = por %p136, %p137
    %p139 = scmp.ne.s32.totalorder %s128, %s129
    %p140 = scmp.eq.s32.totalorder %s15, 0
    %p141 = por %p139, %p140
    %p142 = scmp.ne.s32.totalorder %s128, %s129
    %p143 = scmp.eq.s32.totalorder %s16, 1
    %p144 = por %p142, %p143
    %p146 = scmp.ne.s32.totalorder %s129, %s145
    %p147 = scmp.eq.s32.totalorder %s16, 0
    %p148 = por %p146, %p147
    %p149 = scmp.le.s32.totalorder 1, %s10
    %p150 = scmp.lt.s32.totalorder %s10, 3
    %p151 = pnand %p149, %p150
    %p152 = pneg %p151
    // Predicated region
    $region9: #{_conv_bn_jit.2} parent=5 // pred_check
      _
    $region10: #{_conv_bn_jit.2} parent=5 // pred_check_branch
      %154 = sbr.rel (%p151) target = $region12
    $region11: #{_conv_bn_jit.2} parent=5 // pred_region
      %s155 = ssub.s32 %s10, 1
      // Predicated region
      $region13: #{_conv_bn_jit.2} parent=11 // pred_check
        %p156 = pneg %p85
      $region14: #{_conv_bn_jit.2} parent=11 // pred_check_branch
        %158 = sbr.rel (%p156) target = $region16
      $region15: #{_conv_bn_jit.2} parent=11 // pred_region
        %s159 = smul.u32 32, %s22
        %p160 = scmp.lt.s32.totalorder %s159, 31
        %s161 = scalar_select %p160, %s159, 31
        %p162 = scmp.lt.s32.totalorder %s21, 0
        %s163 = scalar_select %p162, %s21, 0
        %s164 = sadd.s32 %s163, %s161
        %s165 = smul.addr %s164, 4
        %s166 = scalar_lea.vmem %s1, %s165
        %s167 = smul.u32 32, %s22
      $region16: #{_conv_bn_jit.2} parent=11 // pred_fallthru
        _
    $region12: #{_conv_bn_jit.2} parent=5 // pred_fallthru
      _
    %p168 = scmp.lt.s32.totalorder %s10, 2
    // Predicated region
    $region17: #{_conv_bn_jit.2} parent=5 // pred_check
      %p169 = pneg %p168
    $region18: #{_conv_bn_jit.2} parent=5 // pred_check_branch
      %171 = sbr.rel (%p169) target = $region20
    $region19: #{_conv_bn_jit.2} parent=5 // pred_region
      // Predicated region
      $region21: #{_conv_bn_jit.2} parent=19 // pred_check
        %p172 = pneg %p51
      $region22: #{_conv_bn_jit.2} parent=19 // pred_check_branch
        %174 = sbr.rel (%p172) target = $region24
      $region23: #{_conv_bn_jit.2} parent=19 // pred_region
        %s175 = smul.u32 64, %s17
        %s176 = smul.u32 2, %s19
        %p177 = scmp.lt.s32.totalorder %s175, 127
        %s178 = scalar_select %p177, %s175, 127
        %p179 = scmp.lt.s32.totalorder %s176, 1
        %s180 = scalar_select %p179, %s176, 1
        %s181 = smul.addr %s178, 2
        %s182 = sadd.s32 %s180, %s181
        %s183 = smul.addr %s182, 4
        %s184 = scalar_lea.vmem %s0, %s183
        %s185 = smul.u32 64, %s17
        %s186 = smul.u32 2, %s19
      $region24: #{_conv_bn_jit.2} parent=19 // pred_fallthru
        _
    $region20: #{_conv_bn_jit.2} parent=5 // pred_fallthru
      _
    %p187 = scmp.le.s32.totalorder 1, %s10
    %p188 = scmp.lt.s32.totalorder %s10, 3
    %p189 = pnand %p187, %p188
    %p190 = pneg %p189
    // Predicated region
    $region25: #{_conv_bn_jit.2} parent=5 // pred_check
      _
    $region26: #{_conv_bn_jit.2} parent=5 // pred_check_branch
      %192 = sbr.rel (%p189) target = $region28
    $region27: #{_conv_bn_jit.2} parent=5 // pred_region
      %s193 = ssub.s32 %s10, 1
      %s194 = smul.u32 64, %s20
      %s195 = smul.u32 2, %s22
      %p196 = scmp.lt.s32.totalorder %s194, 127
      %s197 = scalar_select %p196, %s194, 127
      %p198 = scmp.lt.s32.totalorder %s195, 1
      %s199 = scalar_select %p198, %s195, 1
      %s200 = smul.addr %s197, 2
      %s201 = sadd.s32 %s199, %s200
      %s202 = smul.addr %s201, 4
      %s203 = scalar_lea.vmem %s0, %s202
      %p204 = pneg %p57
      %p205 = pneg %p54
      %s206 = smul.u32 32, %s22
      %p207 = scmp.lt.s32.totalorder %s206, 31
      %s208 = scalar_select %p207, %s206, 31
      %p209 = scmp.lt.s32.totalorder %s21, 0
      %s210 = scalar_select %p209, %s21, 0
      %s211 = sadd.s32 %s210, %s208
      %s212 = smul.addr %s211, 4
      %s213 = scalar_lea.vmem %s1, %s212
      %p214 = pneg %p85
      %p215 = pneg %p82
      %p216 = pneg %p113
      %p217 = pneg %p110
      %s218 = smul.u32 64, %s20
      %p219 = scmp.lt.s32.totalorder %s218, 127
      %s220 = scalar_select %p219, %s218, 127
      %p221 = scmp.lt.s32.totalorder %s21, 0
      %s222 = scalar_select %p221, %s21, 0
      %s223 = sadd.s32 %s222, %s220
      %s224 = smul.addr %s223, 4
      %s225 = scalar_lea.vmem %s2, %s224
      %p226 = pneg %p141
      %p227 = pneg %p138
      %p228 = scmp.lt.s32.totalorder %s20, 1
      %s229 = scalar_select %p228, %s20, 1
      %p230 = scmp.lt.s32.totalorder %s21, 0
      %s231 = scalar_select %p230, %s21, 0
      %s232 = sadd.s32 %s231, %s229
      %s233 = smul.addr %s232, 2
      %s234 = scalar_lea.vmem %s3, %s233
      %s235 = smul.u32 64, %s20
      %s236 = smul.u32 2, %s22
      %p237 = scmp.lt.s32.totalorder %s235, 127
      %s238 = scalar_select %p237, %s235, 127
      %p239 = scmp.lt.s32.totalorder %s236, 1
      %s240 = scalar_select %p239, %s236, 1
      %s241 = smul.addr %s238, 2
      %s242 = sadd.s32 %s240, %s241
      %s243 = smul.addr %s242, 4
      %s244 = scalar_lea.vmem %s0, %s243
      %s245 = smul.u32 64, %s20
      %s246 = smul.u32 2, %s22
      %s247 = smul.u32 32, %s22
      %p248 = scmp.lt.s32.totalorder %s247, 31
      %s249 = scalar_select %p248, %s247, 31
      %p250 = scmp.lt.s32.totalorder %s21, 0
      %s251 = scalar_select %p250, %s21, 0
      %s252 = sadd.s32 %s251, %s249
      %s253 = smul.addr %s252, 4
      %s254 = scalar_lea.vmem %s1, %s253
      %s255 = smul.u32 32, %s22
      %s256 = smul.u32 64, %s20
      %p257 = scmp.lt.s32.totalorder %s256, 127
      %s258 = scalar_select %p257, %s256, 127
      %p259 = scmp.lt.s32.totalorder %s21, 0
      %s260 = scalar_select %p259, %s21, 0
      %s261 = sadd.s32 %s260, %s258
      %s262 = smul.addr %s261, 4
      %s263 = scalar_lea.vmem %s2, %s262
      %s264 = smul.u32 64, %s20
      %p265 = scmp.lt.s32.totalorder %s20, 1
      %s266 = scalar_select %p265, %s20, 1
      %p267 = scmp.lt.s32.totalorder %s21, 0
      %s268 = scalar_select %p267, %s21, 0
      %s269 = sadd.s32 %s268, %s266
      %s270 = smul.addr %s269, 2
      %s271 = scalar_lea.vmem %s3, %s270
      %p273 = scmp.eq.s32.totalorder %s22, 0
      // Predicated region
      $region29: #{_conv_bn_jit.2} parent=27 // pred_check
        %p274 = pneg %p273
      $region30: #{_conv_bn_jit.2} parent=27 // pred_check_branch
        %276 = sbr.rel (%p274) target = $region32
      $region31: #{_conv_bn_jit.2} parent=27 // pred_region
        %277 = vst [vmem:[#allocation2] sm:$0xff] 0.0
        %278 = vst [vmem:[#allocation2 + $0x8] sm:$0xff] 0.0
        %279 = vst [vmem:[#allocation2 + $0x10] sm:$0xff] 0.0
        %280 = vst [vmem:[#allocation2 + $0x18] sm:$0xff] 0.0
        %281 = vst [vmem:[#allocation2 + $0x20] sm:$0xff] 0.0
        %282 = vst [vmem:[#allocation2 + $0x28] sm:$0xff] 0.0
        %283 = vst [vmem:[#allocation2 + $0x30] sm:$0xff] 0.0
        %284 = vst [vmem:[#allocation2 + $0x38] sm:$0xff] 0.0
        %285 = vst [vmem:[#allocation2 + $0x40] sm:$0xff] 0.0
        %286 = vst [vmem:[#allocation2 + $0x48] sm:$0xff] 0.0
        %287 = vst [vmem:[#allocation2 + $0x50] sm:$0xff] 0.0
        %288 = vst [vmem:[#allocation2 + $0x58] sm:$0xff] 0.0
        %289 = vst [vmem:[#allocation2 + $0x60] sm:$0xff] 0.0
        %290 = vst [vmem:[#allocation2 + $0x68] sm:$0xff] 0.0
        %291 = vst [vmem:[#allocation2 + $0x70] sm:$0xff] 0.0
        %292 = vst [vmem:[#allocation2 + $0x78] sm:$0xff] 0.0
        %293 = vst [vmem:[#allocation2 + $0x80] sm:$0xff] 0.0
        %294 = vst [vmem:[#allocation2 + $0x88] sm:$0xff] 0.0
        %295 = vst [vmem:[#allocation2 + $0x90] sm:$0xff] 0.0
        %296 = vst [vmem:[#allocation2 + $0x98] sm:$0xff] 0.0
        %297 = vst [vmem:[#allocation2 + $0xa0] sm:$0xff] 0.0
        %298 = vst [vmem:[#allocation2 + $0xa8] sm:$0xff] 0.0
        %299 = vst [vmem:[#allocation2 + $0xb0] sm:$0xff] 0.0
        %300 = vst [vmem:[#allocation2 + $0xb8] sm:$0xff] 0.0
        %301 = vst [vmem:[#allocation2 + $0xc0] sm:$0xff] 0.0
        %302 = vst [vmem:[#allocation2 + $0xc8] sm:$0xff] 0.0
        %303 = vst [vmem:[#allocation2 + $0xd0] sm:$0xff] 0.0
        %304 = vst [vmem:[#allocation2 + $0xd8] sm:$0xff] 0.0
        %305 = vst [vmem:[#allocation2 + $0xe0] sm:$0xff] 0.0
        %306 = vst [vmem:[#allocation2 + $0xe8] sm:$0xff] 0.0
        %307 = vst [vmem:[#allocation2 + $0xf0] sm:$0xff] 0.0
        %308 = vst [vmem:[#allocation2 + $0xf8] sm:$0xff] 0.0
        %309 = vst [vmem:[#allocation2 + $0x100] sm:$0xff] 0.0
        %310 = vst [vmem:[#allocation2 + $0x108] sm:$0xff] 0.0
        %311 = vst [vmem:[#allocation2 + $0x110] sm:$0xff] 0.0
        %312 = vst [vmem:[#allocation2 + $0x118] sm:$0xff] 0.0
        %313 = vst [vmem:[#allocation2 + $0x120] sm:$0xff] 0.0
        %314 = vst [vmem:[#allocation2 + $0x128] sm:$0xff] 0.0
        %315 = vst [vmem:[#allocation2 + $0x130] sm:$0xff] 0.0
        %316 = vst [vmem:[#allocation2 + $0x138] sm:$0xff] 0.0
        %317 = vst [vmem:[#allocation2 + $0x140] sm:$0xff] 0.0
        %318 = vst [vmem:[#allocation2 + $0x148] sm:$0xff] 0.0
        %319 = vst [vmem:[#allocation2 + $0x150] sm:$0xff] 0.0
        %320 = vst [vmem:[#allocation2 + $0x158] sm:$0xff] 0.0
        %321 = vst [vmem:[#allocation2 + $0x160] sm:$0xff] 0.0
        %322 = vst [vmem:[#allocation2 + $0x168] sm:$0xff] 0.0
        %323 = vst [vmem:[#allocation2 + $0x170] sm:$0xff] 0.0
        %324 = vst [vmem:[#allocation2 + $0x178] sm:$0xff] 0.0
        %325 = vst [vmem:[#allocation2 + $0x180] sm:$0xff] 0.0
        %326 = vst [vmem:[#allocation2 + $0x188] sm:$0xff] 0.0
        %327 = vst [vmem:[#allocation2 + $0x190] sm:$0xff] 0.0
        %328 = vst [vmem:[#allocation2 + $0x198] sm:$0xff] 0.0
        %329 = vst [vmem:[#allocation2 + $0x1a0] sm:$0xff] 0.0
        %330 = vst [vmem:[#allocation2 + $0x1a8] sm:$0xff] 0.0
        %331 = vst [vmem:[#allocation2 + $0x1b0] sm:$0xff] 0.0
        %332 = vst [vmem:[#allocation2 + $0x1b8] sm:$0xff] 0.0
        %333 = vst [vmem:[#allocation2 + $0x1c0] sm:$0xff] 0.0
        %334 = vst [vmem:[#allocation2 + $0x1c8] sm:$0xff] 0.0
        %335 = vst [vmem:[#allocation2 + $0x1d0] sm:$0xff] 0.0
        %336 = vst [vmem:[#allocation2 + $0x1d8] sm:$0xff] 0.0
        %337 = vst [vmem:[#allocation2 + $0x1e0] sm:$0xff] 0.0
        %338 = vst [vmem:[#allocation2 + $0x1e8] sm:$0xff] 0.0
        %339 = vst [vmem:[#allocation2 + $0x1f0] sm:$0xff] 0.0
        %340 = vst [vmem:[#allocation2 + $0x1f8] sm:$0xff] 0.0
      $region32: #{_conv_bn_jit.2} parent=27 // pred_fallthru
        _
      %v341 = vld [vmem:[#allocation2] sm:$0xff]
      %v342 = vld [vmem:[#allocation2 + $0x8] sm:$0xff]
      %v343 = vld [vmem:[#allocation2 + $0x10] sm:$0xff]
      %v344 = vld [vmem:[#allocation2 + $0x18] sm:$0xff]
      %v345 = vld [vmem:[#allocation2 + $0x20] sm:$0xff]
      %v346 = vld [vmem:[#allocation2 + $0x28] sm:$0xff]
      %v347 = vld [vmem:[#allocation2 + $0x30] sm:$0xff]
      %v348 = vld [vmem:[#allocation2 + $0x38] sm:$0xff]
      %v349 = vld [vmem:[#allocation2 + $0x40] sm:$0xff]
      %v350 = vld [vmem:[#allocation2 + $0x48] sm:$0xff]
      %v351 = vld [vmem:[#allocation2 + $0x50] sm:$0xff]
      %v352 = vld [vmem:[#allocation2 + $0x58] sm:$0xff]
      %v353 = vld [vmem:[#allocation2 + $0x60] sm:$0xff]
      %v354 = vld [vmem:[#allocation2 + $0x68] sm:$0xff]
      %v355 = vld [vmem:[#allocation2 + $0x70] sm:$0xff]
      %v356 = vld [vmem:[#allocation2 + $0x78] sm:$0xff]
      %v357 = vld [vmem:[#allocation2 + $0x80] sm:$0xff]
      %v358 = vld [vmem:[#allocation2 + $0x88] sm:$0xff]
      %v359 = vld [vmem:[#allocation2 + $0x90] sm:$0xff]
      %v360 = vld [vmem:[#allocation2 + $0x98] sm:$0xff]
      %v361 = vld [vmem:[#allocation2 + $0xa0] sm:$0xff]
      %v362 = vld [vmem:[#allocation2 + $0xa8] sm:$0xff]
      %v363 = vld [vmem:[#allocation2 + $0xb0] sm:$0xff]
      %v364 = vld [vmem:[#allocation2 + $0xb8] sm:$0xff]
      %v365 = vld [vmem:[#allocation2 + $0xc0] sm:$0xff]
      %v366 = vld [vmem:[#allocation2 + $0xc8] sm:$0xff]
      %v367 = vld [vmem:[#allocation2 + $0xd0] sm:$0xff]
      %v368 = vld [vmem:[#allocation2 + $0xd8] sm:$0xff]
      %v369 = vld [vmem:[#allocation2 + $0xe0] sm:$0xff]
      %v370 = vld [vmem:[#allocation2 + $0xe8] sm:$0xff]
      %v371 = vld [vmem:[#allocation2 + $0xf0] sm:$0xff]
      %v372 = vld [vmem:[#allocation2 + $0xf8] sm:$0xff]
      %v373 = vld [vmem:[#allocation2 + $0x100] sm:$0xff]
      %v374 = vld [vmem:[#allocation2 + $0x108] sm:$0xff]
      %v375 = vld [vmem:[#allocation2 + $0x110] sm:$0xff]
      %v376 = vld [vmem:[#allocation2 + $0x118] sm:$0xff]
      %v377 = vld [vmem:[#allocation2 + $0x120] sm:$0xff]
      %v378 = vld [vmem:[#allocation2 + $0x128] sm:$0xff]
      %v379 = vld [vmem:[#allocation2 + $0x130] sm:$0xff]
      %v380 = vld [vmem:[#allocation2 + $0x138] sm:$0xff]
      %v381 = vld [vmem:[#allocation2 + $0x140] sm:$0xff]
      %v382 = vld [vmem:[#allocation2 + $0x148] sm:$0xff]
      %v383 = vld [vmem:[#allocation2 + $0x150] sm:$0xff]
      %v384 = vld [vmem:[#allocation2 + $0x158] sm:$0xff]
      %v385 = vld [vmem:[#allocation2 + $0x160] sm:$0xff]
      %v386 = vld [vmem:[#allocation2 + $0x168] sm:$0xff]
      %v387 = vld [vmem:[#allocation2 + $0x170] sm:$0xff]
      %v388 = vld [vmem:[#allocation2 + $0x178] sm:$0xff]
      %v389 = vld [vmem:[#allocation2 + $0x180] sm:$0xff]
      %v390 = vld [vmem:[#allocation2 + $0x188] sm:$0xff]
      %v391 = vld [vmem:[#allocation2 + $0x190] sm:$0xff]
      %v392 = vld [vmem:[#allocation2 + $0x198] sm:$0xff]
      %v393 = vld [vmem:[#allocation2 + $0x1a0] sm:$0xff]
      %v394 = vld [vmem:[#allocation2 + $0x1a8] sm:$0xff]
      %v395 = vld [vmem:[#allocation2 + $0x1b0] sm:$0xff]
      %v396 = vld [vmem:[#allocation2 + $0x1b8] sm:$0xff]
      %v397 = vld [vmem:[#allocation2 + $0x1c0] sm:$0xff]
      %v398 = vld [vmem:[#allocation2 + $0x1c8] sm:$0xff]
      %v399 = vld [vmem:[#allocation2 + $0x1d0] sm:$0xff]
      %v400 = vld [vmem:[#allocation2 + $0x1d8] sm:$0xff]
      %v401 = vld [vmem:[#allocation2 + $0x1e0] sm:$0xff]
      %v402 = vld [vmem:[#allocation2 + $0x1e8] sm:$0xff]
      %v403 = vld [vmem:[#allocation2 + $0x1f0] sm:$0xff]
      %v404 = vld [vmem:[#allocation2 + $0x1f8] sm:$0xff]
      %v405 = vld [vmem:[%s244] sm:$0xff]
      %v406 = vld [vmem:[%s244 + $0x8] sm:$0xff]
      %v407 = vld [vmem:[%s244 + $0x10] sm:$0xff]
      %v408 = vld [vmem:[%s244 + $0x18] sm:$0xff]
      %v409 = vld [vmem:[%s244 + $0x20] sm:$0xff]
      %v410 = vld [vmem:[%s244 + $0x28] sm:$0xff]
      %v411 = vld [vmem:[%s244 + $0x30] sm:$0xff]
      %v412 = vld [vmem:[%s244 + $0x38] sm:$0xff]
      %v413 = vld [vmem:[%s244 + $0x40] sm:$0xff]
      %v414 = vld [vmem:[%s244 + $0x48] sm:$0xff]
      %v415 = vld [vmem:[%s244 + $0x50] sm:$0xff]
      %v416 = vld [vmem:[%s244 + $0x58] sm:$0xff]
      %v417 = vld [vmem:[%s244 + $0x60] sm:$0xff]
      %v418 = vld [vmem:[%s244 + $0x68] sm:$0xff]
      %v419 = vld [vmem:[%s244 + $0x70] sm:$0xff]
      %v420 = vld [vmem:[%s244 + $0x78] sm:$0xff]
      %v421 = vld [vmem:[%s244 + $0x80] sm:$0xff]
      %v422 = vld [vmem:[%s244 + $0x88] sm:$0xff]
      %v423 = vld [vmem:[%s244 + $0x90] sm:$0xff]
      %v424 = vld [vmem:[%s244 + $0x98] sm:$0xff]
      %v425 = vld [vmem:[%s244 + $0xa0] sm:$0xff]
      %v426 = vld [vmem:[%s244 + $0xa8] sm:$0xff]
      %v427 = vld [vmem:[%s244 + $0xb0] sm:$0xff]
      %v428 = vld [vmem:[%s244 + $0xb8] sm:$0xff]
      %v429 = vld [vmem:[%s244 + $0xc0] sm:$0xff]
      %v430 = vld [vmem:[%s244 + $0xc8] sm:$0xff]
      %v431 = vld [vmem:[%s244 + $0xd0] sm:$0xff]
      %v432 = vld [vmem:[%s244 + $0xd8] sm:$0xff]
      %v433 = vld [vmem:[%s244 + $0xe0] sm:$0xff]
      %v434 = vld [vmem:[%s244 + $0xe8] sm:$0xff]
      %v435 = vld [vmem:[%s244 + $0xf0] sm:$0xff]
      %v436 = vld [vmem:[%s244 + $0xf8] sm:$0xff]
      %v437 = vld [vmem:[%s244 + $0x100] sm:$0xff]
      %v438 = vld [vmem:[%s244 + $0x108] sm:$0xff]
      %v439 = vld [vmem:[%s244 + $0x110] sm:$0xff]
      %v440 = vld [vmem:[%s244 + $0x118] sm:$0xff]
      %v441 = vld [vmem:[%s244 + $0x120] sm:$0xff]
      %v442 = vld [vmem:[%s244 + $0x128] sm:$0xff]
      %v443 = vld [vmem:[%s244 + $0x130] sm:$0xff]
      %v444 = vld [vmem:[%s244 + $0x138] sm:$0xff]
      %v445 = vld [vmem:[%s244 + $0x140] sm:$0xff]
      %v446 = vld [vmem:[%s244 + $0x148] sm:$0xff]
      %v447 = vld [vmem:[%s244 + $0x150] sm:$0xff]
      %v448 = vld [vmem:[%s244 + $0x158] sm:$0xff]
      %v449 = vld [vmem:[%s244 + $0x160] sm:$0xff]
      %v450 = vld [vmem:[%s244 + $0x168] sm:$0xff]
      %v451 = vld [vmem:[%s244 + $0x170] sm:$0xff]
      %v452 = vld [vmem:[%s244 + $0x178] sm:$0xff]
      %v453 = vld [vmem:[%s244 + $0x180] sm:$0xff]
      %v454 = vld [vmem:[%s244 + $0x188] sm:$0xff]
      %v455 = vld [vmem:[%s244 + $0x190] sm:$0xff]
      %v456 = vld [vmem:[%s244 + $0x198] sm:$0xff]
      %v457 = vld [vmem:[%s244 + $0x1a0] sm:$0xff]
      %v458 = vld [vmem:[%s244 + $0x1a8] sm:$0xff]
      %v459 = vld [vmem:[%s244 + $0x1b0] sm:$0xff]
      %v460 = vld [vmem:[%s244 + $0x1b8] sm:$0xff]
      %v461 = vld [vmem:[%s244 + $0x1c0] sm:$0xff]
      %v462 = vld [vmem:[%s244 + $0x1c8] sm:$0xff]
      %v463 = vld [vmem:[%s244 + $0x1d0] sm:$0xff]
      %v464 = vld [vmem:[%s244 + $0x1d8] sm:$0xff]
      %v465 = vld [vmem:[%s244 + $0x1e0] sm:$0xff]
      %v466 = vld [vmem:[%s244 + $0x1e8] sm:$0xff]
      %v467 = vld [vmem:[%s244 + $0x1f0] sm:$0xff]
      %v468 = vld [vmem:[%s244 + $0x1f8] sm:$0xff]
      %v469 = vld [vmem:[%s254] sm:$0xf]
      %v470 = vld [vmem:[%s254 + $0x4] sm:$0xf]
      %v471 = vld [vmem:[%s254 + $0x8] sm:$0xf]
      %v472 = vld [vmem:[%s254 + $0xc] sm:$0xf]
      %v473 = vld [vmem:[%s254 + $0x10] sm:$0xf]
      %v474 = vld [vmem:[%s254 + $0x14] sm:$0xf]
      %v475 = vld [vmem:[%s254 + $0x18] sm:$0xf]
      %v476 = vld [vmem:[%s254 + $0x1c] sm:$0xf]
      %v477 = vld [vmem:[%s254 + $0x20] sm:$0xf]
      %v478 = vld [vmem:[%s254 + $0x24] sm:$0xf]
      %v479 = vld [vmem:[%s254 + $0x28] sm:$0xf]
      %v480 = vld [vmem:[%s254 + $0x2c] sm:$0xf]
      %v481 = vld [vmem:[%s254 + $0x30] sm:$0xf]
      %v482 = vld [vmem:[%s254 + $0x34] sm:$0xf]
      %v483 = vld [vmem:[%s254 + $0x38] sm:$0xf]
      %v484 = vld [vmem:[%s254 + $0x3c] sm:$0xf]
      %v485 = vld [vmem:[%s254 + $0x40] sm:$0xf]
      %v486 = vld [vmem:[%s254 + $0x44] sm:$0xf]
      %v487 = vld [vmem:[%s254 + $0x48] sm:$0xf]
      %v488 = vld [vmem:[%s254 + $0x4c] sm:$0xf]
      %v489 = vld [vmem:[%s254 + $0x50] sm:$0xf]
      %v490 = vld [vmem:[%s254 + $0x54] sm:$0xf]
      %v491 = vld [vmem:[%s254 + $0x58] sm:$0xf]
      %v492 = vld [vmem:[%s254 + $0x5c] sm:$0xf]
      %v493 = vld [vmem:[%s254 + $0x60] sm:$0xf]
      %v494 = vld [vmem:[%s254 + $0x64] sm:$0xf]
      %v495 = vld [vmem:[%s254 + $0x68] sm:$0xf]
      %v496 = vld [vmem:[%s254 + $0x6c] sm:$0xf]
      %v497 = vld [vmem:[%s254 + $0x70] sm:$0xf]
      %v498 = vld [vmem:[%s254 + $0x74] sm:$0xf]
      %v499 = vld [vmem:[%s254 + $0x78] sm:$0xf]
      %v500 = vld [vmem:[%s254 + $0x7c] sm:$0xf]
      %v565 = vunpack.c.l.b16 %v405
      %v566 = vunpack.c.h.b16 %v405
      %v567 = vunpack.c.l.b16 %v406
      %v568 = vunpack.c.h.b16 %v406
      %v569 = vunpack.c.l.b16 %v407
      %v570 = vunpack.c.h.b16 %v407
      %v571 = vunpack.c.l.b16 %v408
      %v572 = vunpack.c.h.b16 %v408
      %v573 = vunpack.c.l.b16 %v409
      %v574 = vunpack.c.h.b16 %v409
      %v575 = vunpack.c.l.b16 %v410
      %v576 = vunpack.c.h.b16 %v410
      %v577 = vunpack.c.l.b16 %v411
      %v578 = vunpack.c.h.b16 %v411
      %v579 = vunpack.c.l.b16 %v412
      %v580 = vunpack.c.h.b16 %v412
      %v581 = vunpack.c.l.b16 %v413
      %v582 = vunpack.c.h.b16 %v413
      %v583 = vunpack.c.l.b16 %v414
      %v584 = vunpack.c.h.b16 %v414
      %v585 = vunpack.c.l.b16 %v415
      %v586 = vunpack.c.h.b16 %v415
      %v587 = vunpack.c.l.b16 %v416
      %v588 = vunpack.c.h.b16 %v416
      %v589 = vunpack.c.l.b16 %v417
      %v590 = vunpack.c.h.b16 %v417
      %v591 = vunpack.c.l.b16 %v418
      %v592 = vunpack.c.h.b16 %v418
      %v593 = vunpack.c.l.b16 %v419
      %v594 = vunpack.c.h.b16 %v419
      %v595 = vunpack.c.l.b16 %v420
      %v596 = vunpack.c.h.b16 %v420
      %v597 = vunpack.c.l.b16 %v421
      %v598 = vunpack.c.h.b16 %v421
      %v599 = vunpack.c.l.b16 %v422
      %v600 = vunpack.c.h.b16 %v422
      %v601 = vunpack.c.l.b16 %v423
      %v602 = vunpack.c.h.b16 %v423
      %v603 = vunpack.c.l.b16 %v424
      %v604 = vunpack.c.h.b16 %v424
      %v605 = vunpack.c.l.b16 %v425
      %v606 = vunpack.c.h.b16 %v425
      %v607 = vunpack.c.l.b16 %v426
      %v608 = vunpack.c.h.b16 %v426
      %v609 = vunpack.c.l.b16 %v427
      %v610 = vunpack.c.h.b16 %v427
      %v611 = vunpack.c.l.b16 %v428
      %v612 = vunpack.c.h.b16 %v428
      %v613 = vunpack.c.l.b16 %v429
      %v614 = vunpack.c.h.b16 %v429
      %v615 = vunpack.c.l.b16 %v430
      %v616 = vunpack.c.h.b16 %v430
      %v617 = vunpack.c.l.b16 %v431
      %v618 = vunpack.c.h.b16 %v431
      %v619 = vunpack.c.l.b16 %v432
      %v620 = vunpack.c.h.b16 %v432
      %v621 = vunpack.c.l.b16 %v433
      %v622 = vunpack.c.h.b16 %v433
      %v623 = vunpack.c.l.b16 %v434
      %v624 = vunpack.c.h.b16 %v434
      %v625 = vunpack.c.l.b16 %v435
      %v626 = vunpack.c.h.b16 %v435
      %v627 = vunpack.c.l.b16 %v436
      %v628 = vunpack.c.h.b16 %v436
      %v629 = vunpack.c.l.b16 %v437
      %v630 = vunpack.c.h.b16 %v437
      %v631 = vunpack.c.l.b16 %v438
      %v632 = vunpack.c.h.b16 %v438
      %v633 = vunpack.c.l.b16 %v439
      %v634 = vunpack.c.h.b16 %v439
      %v635 = vunpack.c.l.b16 %v440
      %v636 = vunpack.c.h.b16 %v440
      %v637 = vunpack.c.l.b16 %v441
      %v638 = vunpack.c.h.b16 %v441
      %v639 = vunpack.c.l.b16 %v442
      %v640 = vunpack.c.h.b16 %v442
      %v641 = vunpack.c.l.b16 %v443
      %v642 = vunpack.c.h.b16 %v443
      %v643 = vunpack.c.l.b16 %v444
      %v644 = vunpack.c.h.b16 %v444
      %v645 = vunpack.c.l.b16 %v445
      %v646 = vunpack.c.h.b16 %v445
      %v647 = vunpack.c.l.b16 %v446
      %v648 = vunpack.c.h.b16 %v446
      %v649 = vunpack.c.l.b16 %v447
      %v650 = vunpack.c.h.b16 %v447
      %v651 = vunpack.c.l.b16 %v448
      %v652 = vunpack.c.h.b16 %v448
      %v653 = vunpack.c.l.b16 %v449
      %v654 = vunpack.c.h.b16 %v449
      %v655 = vunpack.c.l.b16 %v450
      %v656 = vunpack.c.h.b16 %v450
      %v657 = vunpack.c.l.b16 %v451
      %v658 = vunpack.c.h.b16 %v451
      %v659 = vunpack.c.l.b16 %v452
      %v660 = vunpack.c.h.b16 %v452
      %v661 = vunpack.c.l.b16 %v453
      %v662 = vunpack.c.h.b16 %v453
      %v663 = vunpack.c.l.b16 %v454
      %v664 = vunpack.c.h.b16 %v454
      %v665 = vunpack.c.l.b16 %v455
      %v666 = vunpack.c.h.b16 %v455
      %v667 = vunpack.c.l.b16 %v456
      %v668 = vunpack.c.h.b16 %v456
      %v669 = vunpack.c.l.b16 %v457
      %v670 = vunpack.c.h.b16 %v457
      %v671 = vunpack.c.l.b16 %v458
      %v672 = vunpack.c.h.b16 %v458
      %v673 = vunpack.c.l.b16 %v459
      %v674 = vunpack.c.h.b16 %v459
      %v675 = vunpack.c.l.b16 %v460
      %v676 = vunpack.c.h.b16 %v460
      %v677 = vunpack.c.l.b16 %v461
      %v678 = vunpack.c.h.b16 %v461
      %v679 = vunpack.c.l.b16 %v462
      %v680 = vunpack.c.h.b16 %v462
      %v681 = vunpack.c.l.b16 %v463
      %v682 = vunpack.c.h.b16 %v463
      %v683 = vunpack.c.l.b16 %v464
      %v684 = vunpack.c.h.b16 %v464
      %v685 = vunpack.c.l.b16 %v465
      %v686 = vunpack.c.h.b16 %v465
      %v687 = vunpack.c.l.b16 %v466
      %v688 = vunpack.c.h.b16 %v466
      %v689 = vunpack.c.l.b16 %v467
      %v690 = vunpack.c.h.b16 %v467
      %v691 = vunpack.c.l.b16 %v468
      %v692 = vunpack.c.h.b16 %v468
      %v693 = vpack.c.b16 %v567, %v565
      %v694 = vpack.c.b16 %v568, %v566
      %v695 = vpack.c.b16 %v571, %v569
      %v696 = vpack.c.b16 %v572, %v570
      %v697 = vpack.c.b16 %v575, %v573
      %v698 = vpack.c.b16 %v576, %v574
      %v699 = vpack.c.b16 %v579, %v577
      %v700 = vpack.c.b16 %v580, %v578
      %v701 = vpack.c.b16 %v583, %v581
      %v702 = vpack.c.b16 %v584, %v582
      %v703 = vpack.c.b16 %v587, %v585
      %v704 = vpack.c.b16 %v588, %v586
      %v705 = vpack.c.b16 %v591, %v589
      %v706 = vpack.c.b16 %v592, %v590
      %v707 = vpack.c.b16 %v595, %v593
      %v708 = vpack.c.b16 %v596, %v594
      %v709 = vpack.c.b16 %v599, %v597
      %v710 = vpack.c.b16 %v600, %v598
      %v711 = vpack.c.b16 %v603, %v601
      %v712 = vpack.c.b16 %v604, %v602
      %v713 = vpack.c.b16 %v607, %v605
      %v714 = vpack.c.b16 %v608, %v606
      %v715 = vpack.c.b16 %v611, %v609
      %v716 = vpack.c.b16 %v612, %v610
      %v717 = vpack.c.b16 %v615, %v613
      %v718 = vpack.c.b16 %v616, %v614
      %v719 = vpack.c.b16 %v619, %v617
      %v720 = vpack.c.b16 %v620, %v618
      %v721 = vpack.c.b16 %v623, %v621
      %v722 = vpack.c.b16 %v624, %v622
      %v723 = vpack.c.b16 %v627, %v625
      %v724 = vpack.c.b16 %v628, %v626
      %v725 = vpack.c.b16 %v631, %v629
      %v726 = vpack.c.b16 %v632, %v630
      %v727 = vpack.c.b16 %v635, %v633
      %v728 = vpack.c.b16 %v636, %v634
      %v729 = vpack.c.b16 %v639, %v637
      %v730 = vpack.c.b16 %v640, %v638
      %v731 = vpack.c.b16 %v643, %v641
      %v732 = vpack.c.b16 %v644, %v642
      %v733 = vpack.c.b16 %v647, %v645
      %v734 = vpack.c.b16 %v648, %v646
      %v735 = vpack.c.b16 %v651, %v649
      %v736 = vpack.c.b16 %v652, %v650
      %v737 = vpack.c.b16 %v655, %v653
      %v738 = vpack.c.b16 %v656, %v654
      %v739 = vpack.c.b16 %v659, %v657
      %v740 = vpack.c.b16 %v660, %v658
      %v741 = vpack.c.b16 %v663, %v661
      %v742 = vpack.c.b16 %v664, %v662
      %v743 = vpack.c.b16 %v667, %v665
      %v744 = vpack.c.b16 %v668, %v666
      %v745 = vpack.c.b16 %v671, %v669
      %v746 = vpack.c.b16 %v672, %v670
      %v747 = vpack.c.b16 %v675, %v673
      %v748 = vpack.c.b16 %v676, %v674
      %v749 = vpack.c.b16 %v679, %v677
      %v750 = vpack.c.b16 %v680, %v678
      %v751 = vpack.c.b16 %v683, %v681
      %v752 = vpack.c.b16 %v684, %v682
      %v753 = vpack.c.b16 %v687, %v685
      %v754 = vpack.c.b16 %v688, %v686
      %v755 = vpack.c.b16 %v691, %v689
      %v756 = vpack.c.b16 %v692, %v690
      %v853 = vunpack.c.l.b16 %v469
      %v854 = vunpack.c.l.b16 %v470
      %v855 = vunpack.c.l.b16 %v471
      %v856 = vunpack.c.l.b16 %v472
      %v857 = vunpack.c.l.b16 %v473
      %v858 = vunpack.c.l.b16 %v474
      %v859 = vunpack.c.l.b16 %v475
      %v860 = vunpack.c.l.b16 %v476
      %v861 = vunpack.c.l.b16 %v477
      %v862 = vunpack.c.l.b16 %v478
      %v863 = vunpack.c.l.b16 %v479
      %v864 = vunpack.c.l.b16 %v480
      %v865 = vunpack.c.l.b16 %v481
      %v866 = vunpack.c.l.b16 %v482
      %v867 = vunpack.c.l.b16 %v483
      %v868 = vunpack.c.l.b16 %v484
      %v869 = vunpack.c.l.b16 %v485
      %v870 = vunpack.c.l.b16 %v486
      %v871 = vunpack.c.l.b16 %v487
      %v872 = vunpack.c.l.b16 %v488
      %v873 = vunpack.c.l.b16 %v489
      %v874 = vunpack.c.l.b16 %v490
      %v875 = vunpack.c.l.b16 %v491
      %v876 = vunpack.c.l.b16 %v492
      %v877 = vunpack.c.l.b16 %v493
      %v878 = vunpack.c.l.b16 %v494
      %v879 = vunpack.c.l.b16 %v495
      %v880 = vunpack.c.l.b16 %v496
      %v881 = vunpack.c.l.b16 %v497
      %v882 = vunpack.c.l.b16 %v498
      %v883 = vunpack.c.l.b16 %v499
      %v884 = vunpack.c.l.b16 %v500
      %v885 = vpack.c.b16 %v854, %v853
      %v886 = vpack.c.b16 %v856, %v855
      %v887 = vpack.c.b16 %v858, %v857
      %v888 = vpack.c.b16 %v860, %v859
      %v889 = vpack.c.b16 %v862, %v861
      %v890 = vpack.c.b16 %v864, %v863
      %v891 = vpack.c.b16 %v866, %v865
      %v892 = vpack.c.b16 %v868, %v867
      %v893 = vpack.c.b16 %v870, %v869
      %v894 = vpack.c.b16 %v872, %v871
      %v895 = vpack.c.b16 %v874, %v873
      %v896 = vpack.c.b16 %v876, %v875
      %v897 = vpack.c.b16 %v878, %v877
      %v898 = vpack.c.b16 %v880, %v879
      %v899 = vpack.c.b16 %v882, %v881
      %v900 = vpack.c.b16 %v884, %v883
      %917 = vmatprep.subr.bf16.mxu0 0
      %918 = vmatpush1.bf16.msra.mxu0 %v885
      %919 = vmatprep.subr.bf16.mxu0 0
      %920 = vmatpush1.bf16.msra.mxu0 %v886
      %921 = vmatprep.subr.bf16.mxu0 0
      %922 = vmatpush1.bf16.msra.mxu0 %v887
      %923 = vmatprep.subr.bf16.mxu0 0
      %924 = vmatpush1.bf16.msra.mxu0 %v888
      %925 = vmatprep.subr.bf16.mxu0 0
      %926 = vmatpush1.bf16.msra.mxu0 %v889
      %927 = vmatprep.subr.bf16.mxu0 0
      %928 = vmatpush1.bf16.msra.mxu0 %v890
      %929 = vmatprep.subr.bf16.mxu0 0
      %930 = vmatpush1.bf16.msra.mxu0 %v891
      %931 = vmatprep.subr.bf16.mxu0 0
      %932 = vmatpush1.bf16.msra.mxu0 %v892
      %933 = vmatprep.subr.bf16.mxu0 0
      %934 = vmatpush1.bf16.msra.mxu0 %v893
      %935 = vmatprep.subr.bf16.mxu0 0
      %936 = vmatpush1.bf16.msra.mxu0 %v894
      %937 = vmatprep.subr.bf16.mxu0 0
      %938 = vmatpush1.bf16.msra.mxu0 %v895
      %939 = vmatprep.subr.bf16.mxu0 0
      %940 = vmatpush1.bf16.msra.mxu0 %v896
      %941 = vmatprep.subr.bf16.mxu0 0
      %942 = vmatpush1.bf16.msra.mxu0 %v897
      %943 = vmatprep.subr.bf16.mxu0 0
      %944 = vmatpush1.bf16.msra.mxu0 %v898
      %945 = vmatprep.subr.bf16.mxu0 0
      %946 = vmatpush1.bf16.msra.mxu0 %v899
      %947 = vmatprep.subr.bf16.mxu0 0
      %948 = vmatpush1.bf16.msra.mxu0 %v900
      %949 = vmatprep.mubr.bf16.mxu0 %v694
      %950 = vmatmul.mubr.bf16.gmra.mrb[0].mxu0 %v693
      %v951 = vpop.f32.mrb[0].mxu0
      %v952 = vadd.f32 0.0, %v951
      %v953 = vpop.f32.mrb[0].mxu0
      %v954 = vpop.f32.mrb[0].mxu0
      %v955 = vadd.f32 0.0, %v954
      %v956 = vpop.f32.mrb[0].mxu0
      %957 = vmatprep.mubr.bf16.mxu0 %v696
      %958 = vmatmul.mubr.bf16.gmra.mrb[0].mxu0 %v695
      %v959 = vpop.f32.mrb[0].mxu0
      %v960 = vadd.f32 0.0, %v959
      %v961 = vpop.f32.mrb[0].mxu0
      %v962 = vpop.f32.mrb[0].mxu0
      %v963 = vadd.f32 0.0, %v962
      %v964 = vpop.f32.mrb[0].mxu0
      %965 = vmatprep.mubr.bf16.mxu0 %v698
      %966 = vmatmul.mubr.bf16.gmra.mrb[0].mxu0 %v697
      %v967 = vpop.f32.mrb[0].mxu0
      %v968 = vadd.f32 0.0, %v967
      %v969 = vpop.f32.mrb[0].mxu0
      %v970 = vpop.f32.mrb[0].mxu0
      %v971 = vadd.f32 0.0, %v970
      %v972 = vpop.f32.mrb[0].mxu0
      %973 = vmatprep.mubr.bf16.mxu0 %v700
      %974 = vmatmul.mubr.bf16.gmra.mrb[0].mxu0 %v699
      %v975 = vpop.f32.mrb[0].mxu0
      %v976 = vadd.f32 0.0, %v975
      %v977 = vpop.f32.mrb[0].mxu0
      %v978 = vpop.f32.mrb[0].mxu0
      %v979 = vadd.f32 0.0, %v978
      %v980 = vpop.f32.mrb[0].mxu0
      %981 = vmatprep.mubr.bf16.mxu0 %v702
      %982 = vmatmul.mubr.bf16.gmra.mrb[0].mxu0 %v701
      %v983 = vpop.f32.mrb[0].mxu0
      %v984 = vadd.f32 0.0, %v983
      %v985 = vpop.f32.mrb[0].mxu0
      %v986 = vpop.f32.mrb[0].mxu0
      %v987 = vadd.f32 0.0, %v986
      %v988 = vpop.f32.mrb[0].mxu0
      %989 = vmatprep.mubr.bf16.mxu0 %v704
      %990 = vmatmul.mubr.bf16.gmra.mrb[0].mxu0 %v703
      %v991 = vpop.f32.mrb[0].mxu0
      %v992 = vadd.f32 0.0, %v991
      %v993 = vpop.f32.mrb[0].mxu0
      %v994 = vpop.f32.mrb[0].mxu0
      %v995 = vadd.f32 0.0, %v994
      %v996 = vpop.f32.mrb[0].mxu0
      %997 = vmatprep.mubr.bf16.mxu0 %v706
      %998 = vmatmul.mubr.bf16.gmra.mrb[0].mxu0 %v705
      %v999 = vpop.f32.mrb[0].mxu0
      %v1000 = vadd.f32 0.0, %v999
      %v1001 = vpop.f32.mrb[0].mxu0
      %v1002 = vpop.f32.mrb[0].mxu0
      %v1003 = vadd.f32 0.0, %v1002
      %v1004 = vpop.f32.mrb[0].mxu0
      %1005 = vmatprep.mubr.bf16.mxu0 %v708
      %1006 = vmatmul.mubr.bf16.gmra.mrb[0].mxu0 %v707
      %v1007 = vpop.f32.mrb[0].mxu0
      %v1008 = vadd.f32 0.0, %v1007
      %v1009 = vpop.f32.mrb[0].mxu0
      %v1010 = vpop.f32.mrb[0].mxu0
      %v1011 = vadd.f32 0.0, %v1010
      %v1012 = vpop.f32.mrb[0].mxu0
      %1013 = vmatprep.mubr.bf16.mxu0 %v710
      %1014 = vmatmul.mubr.bf16.gmra.mrb[0].mxu0 %v709
      %v1015 = vpop.f32.mrb[0].mxu0
      %v1016 = vadd.f32 0.0, %v1015
      %v1017 = vpop.f32.mrb[0].mxu0
      %v1018 = vpop.f32.mrb[0].mxu0
      %v1019 = vadd.f32 0.0, %v1018
      %v1020 = vpop.f32.mrb[0].mxu0
      %1021 = vmatprep.mubr.bf16.mxu0 %v712
      %1022 = vmatmul.mubr.bf16.gmra.mrb[0].mxu0 %v711
      %v1023 = vpop.f32.mrb[0].mxu0
      %v1024 = vadd.f32 0.0, %v1023
      %v1025 = vpop.f32.mrb[0].mxu0
      %v1026 = vpop.f32.mrb[0].mxu0
      %v1027 = vadd.f32 0.0, %v1026
      %v1028 = vpop.f32.mrb[0].mxu0
      %1029 = vmatprep.mubr.bf16.mxu0 %v714
      %1030 = vmatmul.mubr.bf16.gmra.mrb[0].mxu0 %v713
      %v1031 = vpop.f32.mrb[0].mxu0
      %v1032 = vadd.f32 0.0, %v1031
      %v1033 = vpop.f32.mrb[0].mxu0
      %v1034 = vpop.f32.mrb[0].mxu0
      %v1035 = vadd.f32 0.0, %v1034
      %v1036 = vpop.f32.mrb[0].mxu0
      %1037 = vmatprep.mubr.bf16.mxu0 %v716
      %1038 = vmatmul.mubr.bf16.gmra.mrb[0].mxu0 %v715
      %v1039 = vpop.f32.mrb[0].mxu0
      %v1040 = vadd.f32 0.0, %v1039
      %v1041 = vpop.f32.mrb[0].mxu0
      %v1042 = vpop.f32.mrb[0].mxu0
      %v1043 = vadd.f32 0.0, %v1042
      %v1044 = vpop.f32.mrb[0].mxu0
      %1045 = vmatprep.mubr.bf16.mxu0 %v718
      %1046 = vmatmul.mubr.bf16.gmra.mrb[0].mxu0 %v717
      %v1047 = vpop.f32.mrb[0].mxu0
      %v1048 = vadd.f32 0.0, %v1047
      %v1049 = vpop.f32.mrb[0].mxu0
      %v1050 = vpop.f32.mrb[0].mxu0
      %v1051 = vadd.f32 0.0, %v1050
      %v1052 = vpop.f32.mrb[0].mxu0
      %1053 = vmatprep.mubr.bf16.mxu0 %v720
      %1054 = vmatmul.mubr.bf16.gmra.mrb[0].mxu0 %v719
      %v1055 = vpop.f32.mrb[0].mxu0
      %v1056 = vadd.f32 0.0, %v1055
      %v1057 = vpop.f32.mrb[0].mxu0
      %v1058 = vpop.f32.mrb[0].mxu0
      %v1059 = vadd.f32 0.0, %v1058
      %v1060 = vpop.f32.mrb[0].mxu0
      %1061 = vmatprep.mubr.bf16.mxu0 %v722
      %1062 = vmatmul.mubr.bf16.gmra.mrb[0].mxu0 %v721
      %v1063 = vpop.f32.mrb[0].mxu0
      %v1064 = vadd.f32 0.0, %v1063
      %v1065 = vpop.f32.mrb[0].mxu0
      %v1066 = vpop.f32.mrb[0].mxu0
      %v1067 = vadd.f32 0.0, %v1066
      %v1068 = vpop.f32.mrb[0].mxu0
      %1069 = vmatprep.mubr.bf16.mxu0 %v724
      %1070 = vmatmul.mubr.bf16.gmra.mrb[0].mxu0 %v723
      %v1071 = vpop.f32.mrb[0].mxu0
      %v1072 = vadd.f32 0.0, %v1071
      %v1073 = vpop.f32.mrb[0].mxu0
      %v1074 = vpop.f32.mrb[0].mxu0
      %v1075 = vadd.f32 0.0, %v1074
      %v1076 = vpop.f32.mrb[0].mxu0
      %1077 = vmatprep.mubr.bf16.mxu0 %v726
      %1078 = vmatmul.mubr.bf16.gmra.mrb[0].mxu0 %v725
      %v1079 = vpop.f32.mrb[0].mxu0
      %v1080 = vadd.f32 0.0, %v1079
      %v1081 = vpop.f32.mrb[0].mxu0
      %v1082 = vpop.f32.mrb[0].mxu0
      %v1083 = vadd.f32 0.0, %v1082
      %v1084 = vpop.f32.mrb[0].mxu0
      %1085 = vmatprep.mubr.bf16.mxu0 %v728
      %1086 = vmatmul.mubr.bf16.gmra.mrb[0].mxu0 %v727
      %v1087 = vpop.f32.mrb[0].mxu0
      %v1088 = vadd.f32 0.0, %v1087
      %v1089 = vpop.f32.mrb[0].mxu0
      %v1090 = vpop.f32.mrb[0].mxu0
      %v1091 = vadd.f32 0.0, %v1090
      %v1092 = vpop.f32.mrb[0].mxu0
      %1093 = vmatprep.mubr.bf16.mxu0 %v730
      %1094 = vmatmul.mubr.bf16.gmra.mrb[0].mxu0 %v729
      %v1095 = vpop.f32.mrb[0].mxu0
      %v1096 = vadd.f32 0.0, %v1095
      %v1097 = vpop.f32.mrb[0].mxu0
      %v1098 = vpop.f32.mrb[0].mxu0
      %v1099 = vadd.f32 0.0, %v1098
      %v1100 = vpop.f32.mrb[0].mxu0
      %1101 = vmatprep.mubr.bf16.mxu0 %v732
      %1102 = vmatmul.mubr.bf16.gmra.mrb[0].mxu0 %v731
      %v1103 = vpop.f32.mrb[0].mxu0
      %v1104 = vadd.f32 0.0, %v1103
      %v1105 = vpop.f32.mrb[0].mxu0
      %v1106 = vpop.f32.mrb[0].mxu0
      %v1107 = vadd.f32 0.0, %v1106
      %v1108 = vpop.f32.mrb[0].mxu0
      %1109 = vmatprep.mubr.bf16.mxu0 %v734
      %1110 = vmatmul.mubr.bf16.gmra.mrb[0].mxu0 %v733
      %v1111 = vpop.f32.mrb[0].mxu0
      %v1112 = vadd.f32 0.0, %v1111
      %v1113 = vpop.f32.mrb[0].mxu0
      %v1114 = vpop.f32.mrb[0].mxu0
      %v1115 = vadd.f32 0.0, %v1114
      %v1116 = vpop.f32.mrb[0].mxu0
      %1117 = vmatprep.mubr.bf16.mxu0 %v736
      %1118 = vmatmul.mubr.bf16.gmra.mrb[0].mxu0 %v735
      %v1119 = vpop.f32.mrb[0].mxu0
      %v1120 = vadd.f32 0.0, %v1119
      %v1121 = vpop.f32.mrb[0].mxu0
      %v1122 = vpop.f32.mrb[0].mxu0
      %v1123 = vadd.f32 0.0, %v1122
      %v1124 = vpop.f32.mrb[0].mxu0
      %1125 = vmatprep.mubr.bf16.mxu0 %v738
      %1126 = vmatmul.mubr.bf16.gmra.mrb[0].mxu0 %v737
      %v1127 = vpop.f32.mrb[0].mxu0
      %v1128 = vadd.f32 0.0, %v1127
      %v1129 = vpop.f32.mrb[0].mxu0
      %v1130 = vpop.f32.mrb[0].mxu0
      %v1131 = vadd.f32 0.0, %v1130
      %v1132 = vpop.f32.mrb[0].mxu0
      %1133 = vmatprep.mubr.bf16.mxu0 %v740
      %1134 = vmatmul.mubr.bf16.gmra.mrb[0].mxu0 %v739
      %v1135 = vpop.f32.mrb[0].mxu0
      %v1136 = vadd.f32 0.0, %v1135
      %v1137 = vpop.f32.mrb[0].mxu0
      %v1138 = vpop.f32.mrb[0].mxu0
      %v1139 = vadd.f32 0.0, %v1138
      %v1140 = vpop.f32.mrb[0].mxu0
      %1141 = vmatprep.mubr.bf16.mxu0 %v742
      %1142 = vmatmul.mubr.bf16.gmra.mrb[0].mxu0 %v741
      %v1143 = vpop.f32.mrb[0].mxu0
      %v1144 = vadd.f32 0.0, %v1143
      %v1145 = vpop.f32.mrb[0].mxu0
      %v1146 = vpop.f32.mrb[0].mxu0
      %v1147 = vadd.f32 0.0, %v1146
      %v1148 = vpop.f32.mrb[0].mxu0
      %1149 = vmatprep.mubr.bf16.mxu0 %v744
      %1150 = vmatmul.mubr.bf16.gmra.mrb[0].mxu0 %v743
      %v1151 = vpop.f32.mrb[0].mxu0
      %v1152 = vadd.f32 0.0, %v1151
      %v1153 = vpop.f32.mrb[0].mxu0
      %v1154 = vpop.f32.mrb[0].mxu0
      %v1155 = vadd.f32 0.0, %v1154
      %v1156 = vpop.f32.mrb[0].mxu0
      %1157 = vmatprep.mubr.bf16.mxu0 %v746
      %1158 = vmatmul.mubr.bf16.gmra.mrb[0].mxu0 %v745
      %v1159 = vpop.f32.mrb[0].mxu0
      %v1160 = vadd.f32 0.0, %v1159
      %v1161 = vpop.f32.mrb[0].mxu0
      %v1162 = vpop.f32.mrb[0].mxu0
      %v1163 = vadd.f32 0.0, %v1162
      %v1164 = vpop.f32.mrb[0].mxu0
      %1165 = vmatprep.mubr.bf16.mxu0 %v748
      %1166 = vmatmul.mubr.bf16.gmra.mrb[0].mxu0 %v747
      %v1167 = vpop.f32.mrb[0].mxu0
      %v1168 = vadd.f32 0.0, %v1167
      %v1169 = vpop.f32.mrb[0].mxu0
      %v1170 = vpop.f32.mrb[0].mxu0
      %v1171 = vadd.f32 0.0, %v1170
      %v1172 = vpop.f32.mrb[0].mxu0
      %1173 = vmatprep.mubr.bf16.mxu0 %v750
      %1174 = vmatmul.mubr.bf16.gmra.mrb[0].mxu0 %v749
      %v1175 = vpop.f32.mrb[0].mxu0
      %v1176 = vadd.f32 0.0, %v1175
      %v1177 = vpop.f32.mrb[0].mxu0
      %v1178 = vpop.f32.mrb[0].mxu0
      %v1179 = vadd.f32 0.0, %v1178
      %v1180 = vpop.f32.mrb[0].mxu0
      %1181 = vmatprep.mubr.bf16.mxu0 %v752
      %1182 = vmatmul.mubr.bf16.gmra.mrb[0].mxu0 %v751
      %v1183 = vpop.f32.mrb[0].mxu0
      %v1184 = vadd.f32 0.0, %v1183
      %v1185 = vpop.f32.mrb[0].mxu0
      %v1186 = vpop.f32.mrb[0].mxu0
      %v1187 = vadd.f32 0.0, %v1186
      %v1188 = vpop.f32.mrb[0].mxu0
      %1189 = vmatprep.mubr.bf16.mxu0 %v754
      %1190 = vmatmul.mubr.bf16.gmra.mrb[0].mxu0 %v753
      %v1191 = vpop.f32.mrb[0].mxu0
      %v1192 = vadd.f32 0.0, %v1191
      %v1193 = vpop.f32.mrb[0].mxu0
      %v1194 = vpop.f32.mrb[0].mxu0
      %v1195 = vadd.f32 0.0, %v1194
      %v1196 = vpop.f32.mrb[0].mxu0
      %1197 = vmatprep.mubr.bf16.mxu0 %v756
      %1198 = vmatmul.mubr.bf16.gmra.mrb[0].mxu0 %v755
      %v1199 = vpop.f32.mrb[0].mxu0
      %v1200 = vadd.f32 0.0, %v1199
      %v1201 = vpop.f32.mrb[0].mxu0
      %v1202 = vpop.f32.mrb[0].mxu0
      %v1203 = vadd.f32 0.0, %v1202
      %v1204 = vpop.f32.mrb[0].mxu0
      %1205 = vdwg.mxu0
      %v1206 = vadd.f32 %v341, %v952
      %v1207 = vadd.f32 %v342, %v955
      %v1208 = vadd.f32 %v343, %v960
      %v1209 = vadd.f32 %v344, %v963
      %v1210 = vadd.f32 %v345, %v968
      %v1211 = vadd.f32 %v346, %v971
      %v1212 = vadd.f32 %v347, %v976
      %v1213 = vadd.f32 %v348, %v979
      %v1214 = vadd.f32 %v349, %v984
      %v1215 = vadd.f32 %v350, %v987
      %v1216 = vadd.f32 %v351, %v992
      %v1217 = vadd.f32 %v352, %v995
      %v1218 = vadd.f32 %v353, %v1000
      %v1219 = vadd.f32 %v354, %v1003
      %v1220 = vadd.f32 %v355, %v1008
      %v1221 = vadd.f32 %v356, %v1011
      %v1222 = vadd.f32 %v357, %v1016
      %v1223 = vadd.f32 %v358, %v1019
      %v1224 = vadd.f32 %v359, %v1024
      %v1225 = vadd.f32 %v360, %v1027
      %v1226 = vadd.f32 %v361, %v1032
      %v1227 = vadd.f32 %v362, %v1035
      %v1228 = vadd.f32 %v363, %v1040
      %v1229 = vadd.f32 %v364, %v1043
      %v1230 = vadd.f32 %v365, %v1048
      %v1231 = vadd.f32 %v366, %v1051
      %v1232 = vadd.f32 %v367, %v1056
      %v1233 = vadd.f32 %v368, %v1059
      %v1234 = vadd.f32 %v369, %v1064
      %v1235 = vadd.f32 %v370, %v1067
      %v1236 = vadd.f32 %v371, %v1072
      %v1237 = vadd.f32 %v372, %v1075
      %v1238 = vadd.f32 %v373, %v1080
      %v1239 = vadd.f32 %v374, %v1083
      %v1240 = vadd.f32 %v375, %v1088
      %v1241 = vadd.f32 %v376, %v1091
      %v1242 = vadd.f32 %v377, %v1096
      %v1243 = vadd.f32 %v378, %v1099
      %v1244 = vadd.f32 %v379, %v1104
      %v1245 = vadd.f32 %v380, %v1107
      %v1246 = vadd.f32 %v381, %v1112
      %v1247 = vadd.f32 %v382, %v1115
      %v1248 = vadd.f32 %v383, %v1120
      %v1249 = vadd.f32 %v384, %v1123
      %v1250 = vadd.f32 %v385, %v1128
      %v1251 = vadd.f32 %v386, %v1131
      %v1252 = vadd.f32 %v387, %v1136
      %v1253 = vadd.f32 %v388, %v1139
      %v1254 = vadd.f32 %v389, %v1144
      %v1255 = vadd.f32 %v390, %v1147
      %v1256 = vadd.f32 %v391, %v1152
      %v1257 = vadd.f32 %v392, %v1155
      %v1258 = vadd.f32 %v393, %v1160
      %v1259 = vadd.f32 %v394, %v1163
      %v1260 = vadd.f32 %v395, %v1168
      %v1261 = vadd.f32 %v396, %v1171
      %v1262 = vadd.f32 %v397, %v1176
      %v1263 = vadd.f32 %v398, %v1179
      %v1264 = vadd.f32 %v399, %v1184
      %v1265 = vadd.f32 %v400, %v1187
      %v1266 = vadd.f32 %v401, %v1192
      %v1267 = vadd.f32 %v402, %v1195
      %v1268 = vadd.f32 %v403, %v1200
      %v1269 = vadd.f32 %v404, %v1203
      %1270 = vst [vmem:[#allocation2] sm:$0xff] %v1206
      %1271 = vst [vmem:[#allocation2 + $0x8] sm:$0xff] %v1207
      %1272 = vst [vmem:[#allocation2 + $0x10] sm:$0xff] %v1208
      %1273 = vst [vmem:[#allocation2 + $0x18] sm:$0xff] %v1209
      %1274 = vst [vmem:[#allocation2 + $0x20] sm:$0xff] %v1210
      %1275 = vst [vmem:[#allocation2 + $0x28] sm:$0xff] %v1211
      %1276 = vst [vmem:[#allocation2 + $0x30] sm:$0xff] %v1212
      %1277 = vst [vmem:[#allocation2 + $0x38] sm:$0xff] %v1213
      %1278 = vst [vmem:[#allocation2 + $0x40] sm:$0xff] %v1214
      %1279 = vst [vmem:[#allocation2 + $0x48] sm:$0xff] %v1215
      %1280 = vst [vmem:[#allocation2 + $0x50] sm:$0xff] %v1216
      %1281 = vst [vmem:[#allocation2 + $0x58] sm:$0xff] %v1217
      %1282 = vst [vmem:[#allocation2 + $0x60] sm:$0xff] %v1218
      %1283 = vst [vmem:[#allocation2 + $0x68] sm:$0xff] %v1219
      %1284 = vst [vmem:[#allocation2 + $0x70] sm:$0xff] %v1220
      %1285 = vst [vmem:[#allocation2 + $0x78] sm:$0xff] %v1221
      %1286 = vst [vmem:[#allocation2 + $0x80] sm:$0xff] %v1222
      %1287 = vst [vmem:[#allocation2 + $0x88] sm:$0xff] %v1223
      %1288 = vst [vmem:[#allocation2 + $0x90] sm:$0xff] %v1224
      %1289 = vst [vmem:[#allocation2 + $0x98] sm:$0xff] %v1225
      %1290 = vst [vmem:[#allocation2 + $0xa0] sm:$0xff] %v1226
      %1291 = vst [vmem:[#allocation2 + $0xa8] sm:$0xff] %v1227
      %1292 = vst [vmem:[#allocation2 + $0xb0] sm:$0xff] %v1228
      %1293 = vst [vmem:[#allocation2 + $0xb8] sm:$0xff] %v1229
      %1294 = vst [vmem:[#allocation2 + $0xc0] sm:$0xff] %v1230
      %1295 = vst [vmem:[#allocation2 + $0xc8] sm:$0xff] %v1231
      %1296 = vst [vmem:[#allocation2 + $0xd0] sm:$0xff] %v1232
      %1297 = vst [vmem:[#allocation2 + $0xd8] sm:$0xff] %v1233
      %1298 = vst [vmem:[#allocation2 + $0xe0] sm:$0xff] %v1234
      %1299 = vst [vmem:[#allocation2 + $0xe8] sm:$0xff] %v1235
      %1300 = vst [vmem:[#allocation2 + $0xf0] sm:$0xff] %v1236
      %1301 = vst [vmem:[#allocation2 + $0xf8] sm:$0xff] %v1237
      %1302 = vst [vmem:[#allocation2 + $0x100] sm:$0xff] %v1238
      %1303 = vst [vmem:[#allocation2 + $0x108] sm:$0xff] %v1239
      %1304 = vst [vmem:[#allocation2 + $0x110] sm:$0xff] %v1240
      %1305 = vst [vmem:[#allocation2 + $0x118] sm:$0xff] %v1241
      %1306 = vst [vmem:[#allocation2 + $0x120] sm:$0xff] %v1242
      %1307 = vst [vmem:[#allocation2 + $0x128] sm:$0xff] %v1243
      %1308 = vst [vmem:[#allocation2 + $0x130] sm:$0xff] %v1244
      %1309 = vst [vmem:[#allocation2 + $0x138] sm:$0xff] %v1245
      %1310 = vst [vmem:[#allocation2 + $0x140] sm:$0xff] %v1246
      %1311 = vst [vmem:[#allocation2 + $0x148] sm:$0xff] %v1247
      %1312 = vst [vmem:[#allocation2 + $0x150] sm:$0xff] %v1248
      %1313 = vst [vmem:[#allocation2 + $0x158] sm:$0xff] %v1249
      %1314 = vst [vmem:[#allocation2 + $0x160] sm:$0xff] %v1250
      %1315 = vst [vmem:[#allocation2 + $0x168] sm:$0xff] %v1251
      %1316 = vst [vmem:[#allocation2 + $0x170] sm:$0xff] %v1252
      %1317 = vst [vmem:[#allocation2 + $0x178] sm:$0xff] %v1253
      %1318 = vst [vmem:[#allocation2 + $0x180] sm:$0xff] %v1254
      %1319 = vst [vmem:[#allocation2 + $0x188] sm:$0xff] %v1255
      %1320 = vst [vmem:[#allocation2 + $0x190] sm:$0xff] %v1256
      %1321 = vst [vmem:[#allocation2 + $0x198] sm:$0xff] %v1257
      %1322 = vst [vmem:[#allocation2 + $0x1a0] sm:$0xff] %v1258
      %1323 = vst [vmem:[#allocation2 + $0x1a8] sm:$0xff] %v1259
      %1324 = vst [vmem:[#allocation2 + $0x1b0] sm:$0xff] %v1260
      %1325 = vst [vmem:[#allocation2 + $0x1b8] sm:$0xff] %v1261
      %1326 = vst [vmem:[#allocation2 + $0x1c0] sm:$0xff] %v1262
      %1327 = vst [vmem:[#allocation2 + $0x1c8] sm:$0xff] %v1263
      %1328 = vst [vmem:[#allocation2 + $0x1d0] sm:$0xff] %v1264
      %1329 = vst [vmem:[#allocation2 + $0x1d8] sm:$0xff] %v1265
      %1330 = vst [vmem:[#allocation2 + $0x1e0] sm:$0xff] %v1266
      %1331 = vst [vmem:[#allocation2 + $0x1e8] sm:$0xff] %v1267
      %1332 = vst [vmem:[#allocation2 + $0x1f0] sm:$0xff] %v1268
      %1333 = vst [vmem:[#allocation2 + $0x1f8] sm:$0xff] %v1269
      // Predicated region
      $region33: #{_conv_bn_jit.2} parent=27 // pred_check
        %p1334 = pneg %p273
      $region34: #{_conv_bn_jit.2} parent=27 // pred_check_branch
        %1336 = sbr.rel (%p1334) target = $region36
      $region35: #{_conv_bn_jit.2} parent=27 // pred_region
        %v1337 = vld [vmem:[#allocation2] sm:$0xff]
        %v1338 = vld [vmem:[#allocation2 + $0x8] sm:$0xff]
        %v1339 = vld [vmem:[#allocation2 + $0x10] sm:$0xff]
        %v1340 = vld [vmem:[#allocation2 + $0x18] sm:$0xff]
        %v1341 = vld [vmem:[#allocation2 + $0x20] sm:$0xff]
        %v1342 = vld [vmem:[#allocation2 + $0x28] sm:$0xff]
        %v1343 = vld [vmem:[#allocation2 + $0x30] sm:$0xff]
        %v1344 = vld [vmem:[#allocation2 + $0x38] sm:$0xff]
        %v1345 = vld [vmem:[#allocation2 + $0x40] sm:$0xff]
        %v1346 = vld [vmem:[#allocation2 + $0x48] sm:$0xff]
        %v1347 = vld [vmem:[#allocation2 + $0x50] sm:$0xff]
        %v1348 = vld [vmem:[#allocation2 + $0x58] sm:$0xff]
        %v1349 = vld [vmem:[#allocation2 + $0x60] sm:$0xff]
        %v1350 = vld [vmem:[#allocation2 + $0x68] sm:$0xff]
        %v1351 = vld [vmem:[#allocation2 + $0x70] sm:$0xff]
        %v1352 = vld [vmem:[#allocation2 + $0x78] sm:$0xff]
        %v1353 = vld [vmem:[#allocation2 + $0x80] sm:$0xff]
        %v1354 = vld [vmem:[#allocation2 + $0x88] sm:$0xff]
        %v1355 = vld [vmem:[#allocation2 + $0x90] sm:$0xff]
        %v1356 = vld [vmem:[#allocation2 + $0x98] sm:$0xff]
        %v1357 = vld [vmem:[#allocation2 + $0xa0] sm:$0xff]
        %v1358 = vld [vmem:[#allocation2 + $0xa8] sm:$0xff]
        %v1359 = vld [vmem:[#allocation2 + $0xb0] sm:$0xff]
        %v1360 = vld [vmem:[#allocation2 + $0xb8] sm:$0xff]
        %v1361 = vld [vmem:[#allocation2 + $0xc0] sm:$0xff]
        %v1362 = vld [vmem:[#allocation2 + $0xc8] sm:$0xff]
        %v1363 = vld [vmem:[#allocation2 + $0xd0] sm:$0xff]
        %v1364 = vld [vmem:[#allocation2 + $0xd8] sm:$0xff]
        %v1365 = vld [vmem:[#allocation2 + $0xe0] sm:$0xff]
        %v1366 = vld [vmem:[#allocation2 + $0xe8] sm:$0xff]
        %v1367 = vld [vmem:[#allocation2 + $0xf0] sm:$0xff]
        %v1368 = vld [vmem:[#allocation2 + $0xf8] sm:$0xff]
        %v1369 = vld [vmem:[#allocation2 + $0x100] sm:$0xff]
        %v1370 = vld [vmem:[#allocation2 + $0x108] sm:$0xff]
        %v1371 = vld [vmem:[#allocation2 + $0x110] sm:$0xff]
        %v1372 = vld [vmem:[#allocation2 + $0x118] sm:$0xff]
        %v1373 = vld [vmem:[#allocation2 + $0x120] sm:$0xff]
        %v1374 = vld [vmem:[#allocation2 + $0x128] sm:$0xff]
        %v1375 = vld [vmem:[#allocation2 + $0x130] sm:$0xff]
        %v1376 = vld [vmem:[#allocation2 + $0x138] sm:$0xff]
        %v1377 = vld [vmem:[#allocation2 + $0x140] sm:$0xff]
        %v1378 = vld [vmem:[#allocation2 + $0x148] sm:$0xff]
        %v1379 = vld [vmem:[#allocation2 + $0x150] sm:$0xff]
        %v1380 = vld [vmem:[#allocation2 + $0x158] sm:$0xff]
        %v1381 = vld [vmem:[#allocation2 + $0x160] sm:$0xff]
        %v1382 = vld [vmem:[#allocation2 + $0x168] sm:$0xff]
        %v1383 = vld [vmem:[#allocation2 + $0x170] sm:$0xff]
        %v1384 = vld [vmem:[#allocation2 + $0x178] sm:$0xff]
        %v1385 = vld [vmem:[#allocation2 + $0x180] sm:$0xff]
        %v1386 = vld [vmem:[#allocation2 + $0x188] sm:$0xff]
        %v1387 = vld [vmem:[#allocation2 + $0x190] sm:$0xff]
        %v1388 = vld [vmem:[#allocation2 + $0x198] sm:$0xff]
        %v1389 = vld [vmem:[#allocation2 + $0x1a0] sm:$0xff]
        %v1390 = vld [vmem:[#allocation2 + $0x1a8] sm:$0xff]
        %v1391 = vld [vmem:[#allocation2 + $0x1b0] sm:$0xff]
        %v1392 = vld [vmem:[#allocation2 + $0x1b8] sm:$0xff]
        %v1393 = vld [vmem:[#allocation2 + $0x1c0] sm:$0xff]
        %v1394 = vld [vmem:[#allocation2 + $0x1c8] sm:$0xff]
        %v1395 = vld [vmem:[#allocation2 + $0x1d0] sm:$0xff]
        %v1396 = vld [vmem:[#allocation2 + $0x1d8] sm:$0xff]
        %v1397 = vld [vmem:[#allocation2 + $0x1e0] sm:$0xff]
        %v1398 = vld [vmem:[#allocation2 + $0x1e8] sm:$0xff]
        %v1399 = vld [vmem:[#allocation2 + $0x1f0] sm:$0xff]
        %v1400 = vld [vmem:[#allocation2 + $0x1f8] sm:$0xff]
        %v1401 = vpack.c.bf16 %v1338, %v1337
        %v1402 = vpack.c.bf16 %v1340, %v1339
        %v1403 = vpack.c.bf16 %v1342, %v1341
        %v1404 = vpack.c.bf16 %v1344, %v1343
        %v1405 = vpack.c.bf16 %v1346, %v1345
        %v1406 = vpack.c.bf16 %v1348, %v1347
        %v1407 = vpack.c.bf16 %v1350, %v1349
        %v1408 = vpack.c.bf16 %v1352, %v1351
        %v1409 = vpack.c.bf16 %v1354, %v1353
        %v1410 = vpack.c.bf16 %v1356, %v1355
        %v1411 = vpack.c.bf16 %v1358, %v1357
        %v1412 = vpack.c.bf16 %v1360, %v1359
        %v1413 = vpack.c.bf16 %v1362, %v1361
        %v1414 = vpack.c.bf16 %v1364, %v1363
        %v1415 = vpack.c.bf16 %v1366, %v1365
        %v1416 = vpack.c.bf16 %v1368, %v1367
        %v1417 = vpack.c.bf16 %v1370, %v1369
        %v1418 = vpack.c.bf16 %v1372, %v1371
        %v1419 = vpack.c.bf16 %v1374, %v1373
        %v1420 = vpack.c.bf16 %v1376, %v1375
        %v1421 = vpack.c.bf16 %v1378, %v1377
        %v1422 = vpack.c.bf16 %v1380, %v1379
        %v1423 = vpack.c.bf16 %v1382, %v1381
        %v1424 = vpack.c.bf16 %v1384, %v1383
        %v1425 = vpack.c.bf16 %v1386, %v1385
        %v1426 = vpack.c.bf16 %v1388, %v1387
        %v1427 = vpack.c.bf16 %v1390, %v1389
        %v1428 = vpack.c.bf16 %v1392, %v1391
        %v1429 = vpack.c.bf16 %v1394, %v1393
        %v1430 = vpack.c.bf16 %v1396, %v1395
        %v1431 = vpack.c.bf16 %v1398, %v1397
        %v1432 = vpack.c.bf16 %v1400, %v1399
        %v1465 = vunpack.c.l.b16 %v1401
        %v1466 = vunpack.c.h.b16 %v1401
        %v1467 = vunpack.c.l.b16 %v1402
        %v1468 = vunpack.c.h.b16 %v1402
        %v1469 = vunpack.c.l.b16 %v1403
        %v1470 = vunpack.c.h.b16 %v1403
        %v1471 = vunpack.c.l.b16 %v1404
        %v1472 = vunpack.c.h.b16 %v1404
        %v1473 = vunpack.c.l.b16 %v1405
        %v1474 = vunpack.c.h.b16 %v1405
        %v1475 = vunpack.c.l.b16 %v1406
        %v1476 = vunpack.c.h.b16 %v1406
        %v1477 = vunpack.c.l.b16 %v1407
        %v1478 = vunpack.c.h.b16 %v1407
        %v1479 = vunpack.c.l.b16 %v1408
        %v1480 = vunpack.c.h.b16 %v1408
        %v1481 = vunpack.c.l.b16 %v1409
        %v1482 = vunpack.c.h.b16 %v1409
        %v1483 = vunpack.c.l.b16 %v1410
        %v1484 = vunpack.c.h.b16 %v1410
        %v1485 = vunpack.c.l.b16 %v1411
        %v1486 = vunpack.c.h.b16 %v1411
        %v1487 = vunpack.c.l.b16 %v1412
        %v1488 = vunpack.c.h.b16 %v1412
        %v1489 = vunpack.c.l.b16 %v1413
        %v1490 = vunpack.c.h.b16 %v1413
        %v1491 = vunpack.c.l.b16 %v1414
        %v1492 = vunpack.c.h.b16 %v1414
        %v1493 = vunpack.c.l.b16 %v1415
        %v1494 = vunpack.c.h.b16 %v1415
        %v1495 = vunpack.c.l.b16 %v1416
        %v1496 = vunpack.c.h.b16 %v1416
        %v1497 = vunpack.c.l.b16 %v1417
        %v1498 = vunpack.c.h.b16 %v1417
        %v1499 = vunpack.c.l.b16 %v1418
        %v1500 = vunpack.c.h.b16 %v1418
        %v1501 = vunpack.c.l.b16 %v1419
        %v1502 = vunpack.c.h.b16 %v1419
        %v1503 = vunpack.c.l.b16 %v1420
        %v1504 = vunpack.c.h.b16 %v1420
        %v1505 = vunpack.c.l.b16 %v1421
        %v1506 = vunpack.c.h.b16 %v1421
        %v1507 = vunpack.c.l.b16 %v1422
        %v1508 = vunpack.c.h.b16 %v1422
        %v1509 = vunpack.c.l.b16 %v1423
        %v1510 = vunpack.c.h.b16 %v1423
        %v1511 = vunpack.c.l.b16 %v1424
        %v1512 = vunpack.c.h.b16 %v1424
        %v1513 = vunpack.c.l.b16 %v1425
        %v1514 = vunpack.c.h.b16 %v1425
        %v1515 = vunpack.c.l.b16 %v1426
        %v1516 = vunpack.c.h.b16 %v1426
        %v1517 = vunpack.c.l.b16 %v1427
        %v1518 = vunpack.c.h.b16 %v1427
        %v1519 = vunpack.c.l.b16 %v1428
        %v1520 = vunpack.c.h.b16 %v1428
        %v1521 = vunpack.c.l.b16 %v1429
        %v1522 = vunpack.c.h.b16 %v1429
        %v1523 = vunpack.c.l.b16 %v1430
        %v1524 = vunpack.c.h.b16 %v1430
        %v1525 = vunpack.c.l.b16 %v1431
        %v1526 = vunpack.c.h.b16 %v1431
        %v1527 = vunpack.c.l.b16 %v1432
        %v1528 = vunpack.c.h.b16 %v1432
        %v1529 = vpack.c.b16 %v1465, %v1465
        %v1530 = vpack.c.b16 %v1466, %v1466
        %v1531 = vpack.c.b16 %v1467, %v1467
        %v1532 = vpack.c.b16 %v1468, %v1468
        %v1533 = vpack.c.b16 %v1469, %v1469
        %v1534 = vpack.c.b16 %v1470, %v1470
        %v1535 = vpack.c.b16 %v1471, %v1471
        %v1536 = vpack.c.b16 %v1472, %v1472
        %v1537 = vpack.c.b16 %v1473, %v1473
        %v1538 = vpack.c.b16 %v1474, %v1474
        %v1539 = vpack.c.b16 %v1475, %v1475
        %v1540 = vpack.c.b16 %v1476, %v1476
        %v1541 = vpack.c.b16 %v1477, %v1477
        %v1542 = vpack.c.b16 %v1478, %v1478
        %v1543 = vpack.c.b16 %v1479, %v1479
        %v1544 = vpack.c.b16 %v1480, %v1480
        %v1545 = vpack.c.b16 %v1481, %v1481
        %v1546 = vpack.c.b16 %v1482, %v1482
        %v1547 = vpack.c.b16 %v1483, %v1483
        %v1548 = vpack.c.b16 %v1484, %v1484
        %v1549 = vpack.c.b16 %v1485, %v1485
        %v1550 = vpack.c.b16 %v1486, %v1486
        %v1551 = vpack.c.b16 %v1487, %v1487
        %v1552 = vpack.c.b16 %v1488, %v1488
        %v1553 = vpack.c.b16 %v1489, %v1489
        %v1554 = vpack.c.b16 %v1490, %v1490
        %v1555 = vpack.c.b16 %v1491, %v1491
        %v1556 = vpack.c.b16 %v1492, %v1492
        %v1557 = vpack.c.b16 %v1493, %v1493
        %v1558 = vpack.c.b16 %v1494, %v1494
        %v1559 = vpack.c.b16 %v1495, %v1495
        %v1560 = vpack.c.b16 %v1496, %v1496
        %v1561 = vpack.c.b16 %v1497, %v1497
        %v1562 = vpack.c.b16 %v1498, %v1498
        %v1563 = vpack.c.b16 %v1499, %v1499
        %v1564 = vpack.c.b16 %v1500, %v1500
        %v1565 = vpack.c.b16 %v1501, %v1501
        %v1566 = vpack.c.b16 %v1502, %v1502
        %v1567 = vpack.c.b16 %v1503, %v1503
        %v1568 = vpack.c.b16 %v1504, %v1504
        %v1569 = vpack.c.b16 %v1505, %v1505
        %v1570 = vpack.c.b16 %v1506, %v1506
        %v1571 = vpack.c.b16 %v1507, %v1507
        %v1572 = vpack.c.b16 %v1508, %v1508
        %v1573 = vpack.c.b16 %v1509, %v1509
        %v1574 = vpack.c.b16 %v1510, %v1510
        %v1575 = vpack.c.b16 %v1511, %v1511
        %v1576 = vpack.c.b16 %v1512, %v1512
        %v1577 = vpack.c.b16 %v1513, %v1513
        %v1578 = vpack.c.b16 %v1514, %v1514
        %v1579 = vpack.c.b16 %v1515, %v1515
        %v1580 = vpack.c.b16 %v1516, %v1516
        %v1581 = vpack.c.b16 %v1517, %v1517
        %v1582 = vpack.c.b16 %v1518, %v1518
        %v1583 = vpack.c.b16 %v1519, %v1519
        %v1584 = vpack.c.b16 %v1520, %v1520
        %v1585 = vpack.c.b16 %v1521, %v1521
        %v1586 = vpack.c.b16 %v1522, %v1522
        %v1587 = vpack.c.b16 %v1523, %v1523
        %v1588 = vpack.c.b16 %v1524, %v1524
        %v1589 = vpack.c.b16 %v1525, %v1525
        %v1590 = vpack.c.b16 %v1526, %v1526
        %v1591 = vpack.c.b16 %v1527, %v1527
        %v1592 = vpack.c.b16 %v1528, %v1528
        %1657 = vst [vmem:[%s263] sm:$0xf] %v1529
        %1658 = vst [vmem:[%s263 + $0x4] sm:$0xf] %v1530
        %1659 = vst [vmem:[%s263 + $0x8] sm:$0xf] %v1531
        %1660 = vst [vmem:[%s263 + $0xc] sm:$0xf] %v1532
        %1661 = vst [vmem:[%s263 + $0x10] sm:$0xf] %v1533
        %1662 = vst [vmem:[%s263 + $0x14] sm:$0xf] %v1534
        %1663 = vst [vmem:[%s263 + $0x18] sm:$0xf] %v1535
        %1664 = vst [vmem:[%s263 + $0x1c] sm:$0xf] %v1536
        %1665 = vst [vmem:[%s263 + $0x20] sm:$0xf] %v1537
        %1666 = vst [vmem:[%s263 + $0x24] sm:$0xf] %v1538
        %1667 = vst [vmem:[%s263 + $0x28] sm:$0xf] %v1539
        %1668 = vst [vmem:[%s263 + $0x2c] sm:$0xf] %v1540
        %1669 = vst [vmem:[%s263 + $0x30] sm:$0xf] %v1541
        %1670 = vst [vmem:[%s263 + $0x34] sm:$0xf] %v1542
        %1671 = vst [vmem:[%s263 + $0x38] sm:$0xf] %v1543
        %1672 = vst [vmem:[%s263 + $0x3c] sm:$0xf] %v1544
        %1673 = vst [vmem:[%s263 + $0x40] sm:$0xf] %v1545
        %1674 = vst [vmem:[%s263 + $0x44] sm:$0xf] %v1546
        %1675 = vst [vmem:[%s263 + $0x48] sm:$0xf] %v1547
        %1676 = vst [vmem:[%s263 + $0x4c] sm:$0xf] %v1548
        %1677 = vst [vmem:[%s263 + $0x50] sm:$0xf] %v1549
        %1678 = vst [vmem:[%s263 + $0x54] sm:$0xf] %v1550
        %1679 = vst [vmem:[%s263 + $0x58] sm:$0xf] %v1551
        %1680 = vst [vmem:[%s263 + $0x5c] sm:$0xf] %v1552
        %1681 = vst [vmem:[%s263 + $0x60] sm:$0xf] %v1553
        %1682 = vst [vmem:[%s263 + $0x64] sm:$0xf] %v1554
        %1683 = vst [vmem:[%s263 + $0x68] sm:$0xf] %v1555
        %1684 = vst [vmem:[%s263 + $0x6c] sm:$0xf] %v1556
        %1685 = vst [vmem:[%s263 + $0x70] sm:$0xf] %v1557
        %1686 = vst [vmem:[%s263 + $0x74] sm:$0xf] %v1558
        %1687 = vst [vmem:[%s263 + $0x78] sm:$0xf] %v1559
        %1688 = vst [vmem:[%s263 + $0x7c] sm:$0xf] %v1560
        %1689 = vst [vmem:[%s263 + $0x80] sm:$0xf] %v1561
        %1690 = vst [vmem:[%s263 + $0x84] sm:$0xf] %v1562
        %1691 = vst [vmem:[%s263 + $0x88] sm:$0xf] %v1563
        %1692 = vst [vmem:[%s263 + $0x8c] sm:$0xf] %v1564
        %1693 = vst [vmem:[%s263 + $0x90] sm:$0xf] %v1565
        %1694 = vst [vmem:[%s263 + $0x94] sm:$0xf] %v1566
        %1695 = vst [vmem:[%s263 + $0x98] sm:$0xf] %v1567
        %1696 = vst [vmem:[%s263 + $0x9c] sm:$0xf] %v1568
        %1697 = vst [vmem:[%s263 + $0xa0] sm:$0xf] %v1569
        %1698 = vst [vmem:[%s263 + $0xa4] sm:$0xf] %v1570
        %1699 = vst [vmem:[%s263 + $0xa8] sm:$0xf] %v1571
        %1700 = vst [vmem:[%s263 + $0xac] sm:$0xf] %v1572
        %1701 = vst [vmem:[%s263 + $0xb0] sm:$0xf] %v1573
        %1702 = vst [vmem:[%s263 + $0xb4] sm:$0xf] %v1574
        %1703 = vst [vmem:[%s263 + $0xb8] sm:$0xf] %v1575
        %1704 = vst [vmem:[%s263 + $0xbc] sm:$0xf] %v1576
        %1705 = vst [vmem:[%s263 + $0xc0] sm:$0xf] %v1577
        %1706 = vst [vmem:[%s263 + $0xc4] sm:$0xf] %v1578
        %1707 = vst [vmem:[%s263 + $0xc8] sm:$0xf] %v1579
        %1708 = vst [vmem:[%s263 + $0xcc] sm:$0xf] %v1580
        %1709 = vst [vmem:[%s263 + $0xd0] sm:$0xf] %v1581
        %1710 = vst [vmem:[%s263 + $0xd4] sm:$0xf] %v1582
        %1711 = vst [vmem:[%s263 + $0xd8] sm:$0xf] %v1583
        %1712 = vst [vmem:[%s263 + $0xdc] sm:$0xf] %v1584
        %1713 = vst [vmem:[%s263 + $0xe0] sm:$0xf] %v1585
        %1714 = vst [vmem:[%s263 + $0xe4] sm:$0xf] %v1586
        %1715 = vst [vmem:[%s263 + $0xe8] sm:$0xf] %v1587
        %1716 = vst [vmem:[%s263 + $0xec] sm:$0xf] %v1588
        %1717 = vst [vmem:[%s263 + $0xf0] sm:$0xf] %v1589
        %1718 = vst [vmem:[%s263 + $0xf4] sm:$0xf] %v1590
        %1719 = vst [vmem:[%s263 + $0xf8] sm:$0xf] %v1591
        %1720 = vst [vmem:[%s263 + $0xfc] sm:$0xf] %v1592
        %v1721 = vadd.f32 %v1337, %v1338
        %v1722 = vadd.f32 %v1721, %v1339
        %v1723 = vadd.f32 %v1722, %v1340
        %v1724 = vadd.f32 %v1723, %v1341
        %v1725 = vadd.f32 %v1724, %v1342
        %v1726 = vadd.f32 %v1725, %v1343
        %v1727 = vadd.f32 %v1726, %v1344
        %v1728 = vadd.f32 %v1727, %v1345
        %v1729 = vadd.f32 %v1728, %v1346
        %v1730 = vadd.f32 %v1729, %v1347
        %v1731 = vadd.f32 %v1730, %v1348
        %v1732 = vadd.f32 %v1731, %v1349
        %v1733 = vadd.f32 %v1732, %v1350
        %v1734 = vadd.f32 %v1733, %v1351
        %v1735 = vadd.f32 %v1734, %v1352
        %v1736 = vadd.f32 %v1735, %v1353
        %v1737 = vadd.f32 %v1736, %v1354
        %v1738 = vadd.f32 %v1737, %v1355
        %v1739 = vadd.f32 %v1738, %v1356
        %v1740 = vadd.f32 %v1739, %v1357
        %v1741 = vadd.f32 %v1740, %v1358
        %v1742 = vadd.f32 %v1741, %v1359
        %v1743 = vadd.f32 %v1742, %v1360
        %v1744 = vadd.f32 %v1743, %v1361
        %v1745 = vadd.f32 %v1744, %v1362
        %v1746 = vadd.f32 %v1745, %v1363
        %v1747 = vadd.f32 %v1746, %v1364
        %v1748 = vadd.f32 %v1747, %v1365
        %v1749 = vadd.f32 %v1748, %v1366
        %v1750 = vadd.f32 %v1749, %v1367
        %v1751 = vadd.f32 %v1750, %v1368
        %v1752 = vadd.f32 %v1751, %v1369
        %v1753 = vadd.f32 %v1752, %v1370
        %v1754 = vadd.f32 %v1753, %v1371
        %v1755 = vadd.f32 %v1754, %v1372
        %v1756 = vadd.f32 %v1755, %v1373
        %v1757 = vadd.f32 %v1756, %v1374
        %v1758 = vadd.f32 %v1757, %v1375
        %v1759 = vadd.f32 %v1758, %v1376
        %v1760 = vadd.f32 %v1759, %v1377
        %v1761 = vadd.f32 %v1760, %v1378
        %v1762 = vadd.f32 %v1761, %v1379
        %v1763 = vadd.f32 %v1762, %v1380
        %v1764 = vadd.f32 %v1763, %v1381
        %v1765 = vadd.f32 %v1764, %v1382
        %v1766 = vadd.f32 %v1765, %v1383
        %v1767 = vadd.f32 %v1766, %v1384
        %v1768 = vadd.f32 %v1767, %v1385
        %v1769 = vadd.f32 %v1768, %v1386
        %v1770 = vadd.f32 %v1769, %v1387
        %v1771 = vadd.f32 %v1770, %v1388
        %v1772 = vadd.f32 %v1771, %v1389
        %v1773 = vadd.f32 %v1772, %v1390
        %v1774 = vadd.f32 %v1773, %v1391
        %v1775 = vadd.f32 %v1774, %v1392
        %v1776 = vadd.f32 %v1775, %v1393
        %v1777 = vadd.f32 %v1776, %v1394
        %v1778 = vadd.f32 %v1777, %v1395
        %v1779 = vadd.f32 %v1778, %v1396
        %v1780 = vadd.f32 %v1779, %v1397
        %v1781 = vadd.f32 %v1780, %v1398
        %v1782 = vadd.f32 %v1781, %v1399
        %v1783 = vadd.f32 %v1782, %v1400
        %v1784 = vrot.slane %v1783, 4
        %v1785 = vadd.f32 %v1783, %v1784
        %v1786 = vrot.slane %v1785, 2
        %v1787 = vadd.f32 %v1785, %v1786
        %v1788 = vrot.slane %v1787, 1
        %v1789 = vadd.f32 %v1787, %v1788
        %v1790 = vmul.f32 %v1337, %v1337
        %v1791 = vmul.f32 %v1338, %v1338
        %v1792 = vmul.f32 %v1339, %v1339
        %v1793 = vmul.f32 %v1340, %v1340
        %v1794 = vmul.f32 %v1341, %v1341
        %v1795 = vmul.f32 %v1342, %v1342
        %v1796 = vmul.f32 %v1343, %v1343
        %v1797 = vmul.f32 %v1344, %v1344
        %v1798 = vmul.f32 %v1345, %v1345
        %v1799 = vmul.f32 %v1346, %v1346
        %v1800 = vmul.f32 %v1347, %v1347
        %v1801 = vmul.f32 %v1348, %v1348
        %v1802 = vmul.f32 %v1349, %v1349
        %v1803 = vmul.f32 %v1350, %v1350
        %v1804 = vmul.f32 %v1351, %v1351
        %v1805 = vmul.f32 %v1352, %v1352
        %v1806 = vmul.f32 %v1353, %v1353
        %v1807 = vmul.f32 %v1354, %v1354
        %v1808 = vmul.f32 %v1355, %v1355
        %v1809 = vmul.f32 %v1356, %v1356
        %v1810 = vmul.f32 %v1357, %v1357
        %v1811 = vmul.f32 %v1358, %v1358
        %v1812 = vmul.f32 %v1359, %v1359
        %v1813 = vmul.f32 %v1360, %v1360
        %v1814 = vmul.f32 %v1361, %v1361
        %v1815 = vmul.f32 %v1362, %v1362
        %v1816 = vmul.f32 %v1363, %v1363
        %v1817 = vmul.f32 %v1364, %v1364
        %v1818 = vmul.f32 %v1365, %v1365
        %v1819 = vmul.f32 %v1366, %v1366
        %v1820 = vmul.f32 %v1367, %v1367
        %v1821 = vmul.f32 %v1368, %v1368
        %v1822 = vmul.f32 %v1369, %v1369
        %v1823 = vmul.f32 %v1370, %v1370
        %v1824 = vmul.f32 %v1371, %v1371
        %v1825 = vmul.f32 %v1372, %v1372
        %v1826 = vmul.f32 %v1373, %v1373
        %v1827 = vmul.f32 %v1374, %v1374
        %v1828 = vmul.f32 %v1375, %v1375
        %v1829 = vmul.f32 %v1376, %v1376
        %v1830 = vmul.f32 %v1377, %v1377
        %v1831 = vmul.f32 %v1378, %v1378
        %v1832 = vmul.f32 %v1379, %v1379
        %v1833 = vmul.f32 %v1380, %v1380
        %v1834 = vmul.f32 %v1381, %v1381
        %v1835 = vmul.f32 %v1382, %v1382
        %v1836 = vmul.f32 %v1383, %v1383
        %v1837 = vmul.f32 %v1384, %v1384
        %v1838 = vmul.f32 %v1385, %v1385
        %v1839 = vmul.f32 %v1386, %v1386
        %v1840 = vmul.f32 %v1387, %v1387
        %v1841 = vmul.f32 %v1388, %v1388
        %v1842 = vmul.f32 %v1389, %v1389
        %v1843 = vmul.f32 %v1390, %v1390
        %v1844 = vmul.f32 %v1391, %v1391
        %v1845 = vmul.f32 %v1392, %v1392
        %v1846 = vmul.f32 %v1393, %v1393
        %v1847 = vmul.f32 %v1394, %v1394
        %v1848 = vmul.f32 %v1395, %v1395
        %v1849 = vmul.f32 %v1396, %v1396
        %v1850 = vmul.f32 %v1397, %v1397
        %v1851 = vmul.f32 %v1398, %v1398
        %v1852 = vmul.f32 %v1399, %v1399
        %v1853 = vmul.f32 %v1400, %v1400
        %v1854 = vadd.f32 %v1790, %v1791
        %v1855 = vadd.f32 %v1854, %v1792
        %v1856 = vadd.f32 %v1855, %v1793
        %v1857 = vadd.f32 %v1856, %v1794
        %v1858 = vadd.f32 %v1857, %v1795
        %v1859 = vadd.f32 %v1858, %v1796
        %v1860 = vadd.f32 %v1859, %v1797
        %v1861 = vadd.f32 %v1860, %v1798
        %v1862 = vadd.f32 %v1861, %v1799
        %v1863 = vadd.f32 %v1862, %v1800
        %v1864 = vadd.f32 %v1863, %v1801
        %v1865 = vadd.f32 %v1864, %v1802
        %v1866 = vadd.f32 %v1865, %v1803
        %v1867 = vadd.f32 %v1866, %v1804
        %v1868 = vadd.f32 %v1867, %v1805
        %v1869 = vadd.f32 %v1868, %v1806
        %v1870 = vadd.f32 %v1869, %v1807
        %v1871 = vadd.f32 %v1870, %v1808
        %v1872 = vadd.f32 %v1871, %v1809
        %v1873 = vadd.f32 %v1872, %v1810
        %v1874 = vadd.f32 %v1873, %v1811
        %v1875 = vadd.f32 %v1874, %v1812
        %v1876 = vadd.f32 %v1875, %v1813
        %v1877 = vadd.f32 %v1876, %v1814
        %v1878 = vadd.f32 %v1877, %v1815
        %v1879 = vadd.f32 %v1878, %v1816
        %v1880 = vadd.f32 %v1879, %v1817
        %v1881 = vadd.f32 %v1880, %v1818
        %v1882 = vadd.f32 %v1881, %v1819
        %v1883 = vadd.f32 %v1882, %v1820
        %v1884 = vadd.f32 %v1883, %v1821
        %v1885 = vadd.f32 %v1884, %v1822
        %v1886 = vadd.f32 %v1885, %v1823
        %v1887 = vadd.f32 %v1886, %v1824
        %v1888 = vadd.f32 %v1887, %v1825
        %v1889 = vadd.f32 %v1888, %v1826
        %v1890 = vadd.f32 %v1889, %v1827
        %v1891 = vadd.f32 %v1890, %v1828
        %v1892 = vadd.f32 %v1891, %v1829
        %v1893 = vadd.f32 %v1892, %v1830
        %v1894 = vadd.f32 %v1893, %v1831
        %v1895 = vadd.f32 %v1894, %v1832
        %v1896 = vadd.f32 %v1895, %v1833
        %v1897 = vadd.f32 %v1896, %v1834
        %v1898 = vadd.f32 %v1897, %v1835
        %v1899 = vadd.f32 %v1898, %v1836
        %v1900 = vadd.f32 %v1899, %v1837
        %v1901 = vadd.f32 %v1900, %v1838
        %v1902 = vadd.f32 %v1901, %v1839
        %v1903 = vadd.f32 %v1902, %v1840
        %v1904 = vadd.f32 %v1903, %v1841
        %v1905 = vadd.f32 %v1904, %v1842
        %v1906 = vadd.f32 %v1905, %v1843
        %v1907 = vadd.f32 %v1906, %v1844
        %v1908 = vadd.f32 %v1907, %v1845
        %v1909 = vadd.f32 %v1908, %v1846
        %v1910 = vadd.f32 %v1909, %v1847
        %v1911 = vadd.f32 %v1910, %v1848
        %v1912 = vadd.f32 %v1911, %v1849
        %v1913 = vadd.f32 %v1912, %v1850
        %v1914 = vadd.f32 %v1913, %v1851
        %v1915 = vadd.f32 %v1914, %v1852
        %v1916 = vadd.f32 %v1915, %v1853
        %v1917 = vrot.slane %v1916, 4
        %v1918 = vadd.f32 %v1916, %v1917
        %v1919 = vrot.slane %v1918, 2
        %v1920 = vadd.f32 %v1918, %v1919
        %v1921 = vrot.slane %v1920, 1
        %v1922 = vadd.f32 %v1920, %v1921
        %vm1923 = vcmask 1040384
        %v1924 = vsel %vm1923, %v1789, %v1922
        %1925 = vst [vmem:[%s271] sm:$0x3] %v1924
      $region36: #{_conv_bn_jit.2} parent=27 // pred_fallthru
        _
      %s1926 = smul.u32 64, %s20
      %p1927 = scmp.lt.s32.totalorder %s1926, 127
      %s1928 = scalar_select %p1927, %s1926, 127
      %p1929 = scmp.lt.s32.totalorder %s21, 0
      %s1930 = scalar_select %p1929, %s21, 0
      %s1931 = sadd.s32 %s1930, %s1928
      %s1932 = smul.addr %s1931, 4
      %s1933 = scalar_lea.vmem %s2, %s1932
      %p1934 = scmp.lt.s32.totalorder %s20, 1
      %s1935 = scalar_select %p1934, %s20, 1
      %p1936 = scmp.lt.s32.totalorder %s21, 0
      %s1937 = scalar_select %p1936, %s21, 0
      %s1938 = sadd.s32 %s1937, %s1935
      %s1939 = smul.addr %s1938, 2
      %s1940 = scalar_lea.vmem %s3, %s1939
      // Predicated region
      $region37: #{_conv_bn_jit.2} parent=27 // pred_check
        %p1941 = pneg %p110
      $region38: #{_conv_bn_jit.2} parent=27 // pred_check_branch
        %1943 = sbr.rel (%p1941) target = $region40
      $region39: #{_conv_bn_jit.2} parent=27 // pred_region
        %s1944 = smul.u32 64, %s20
      $region40: #{_conv_bn_jit.2} parent=27 // pred_fallthru
        _
      // Predicated region
      $region41: #{_conv_bn_jit.2} parent=27 // pred_check
        %p1945 = pneg %p138
      $region42: #{_conv_bn_jit.2} parent=27 // pred_check_branch
        %1947 = sbr.rel (%p1945) target = $region44
      $region43: #{_conv_bn_jit.2} parent=27 // pred_region
        _
      $region44: #{_conv_bn_jit.2} parent=27 // pred_fallthru
        _
    $region28: #{_conv_bn_jit.2} parent=5 // pred_fallthru
      _
    %p1948 = scmp.le.s32.totalorder 2, %s10
    // Predicated region
    $region45: #{_conv_bn_jit.2} parent=5 // pred_check
      %p1949 = pneg %p1948
    $region46: #{_conv_bn_jit.2} parent=5 // pred_check_branch
      %1951 = sbr.rel (%p1949) target = $region48
    $region47: #{_conv_bn_jit.2} parent=5 // pred_region
      %s1952 = ssub.s32 %s10, 2
      // Predicated region
      $region49: #{_conv_bn_jit.2} parent=47 // pred_check
        %p1953 = pneg %p116
      $region50: #{_conv_bn_jit.2} parent=47 // pred_check_branch
        %1955 = sbr.rel (%p1953) target = $region52
      $region51: #{_conv_bn_jit.2} parent=47 // pred_region
        %s1956 = smul.u32 64, %s23
        %p1957 = scmp.lt.s32.totalorder %s1956, 127
        %s1958 = scalar_select %p1957, %s1956, 127
        %p1959 = scmp.lt.s32.totalorder %s24, 0
        %s1960 = scalar_select %p1959, %s24, 0
        %s1961 = sadd.s32 %s1960, %s1958
        %s1962 = smul.addr %s1961, 4
        %s1963 = scalar_lea.vmem %s2, %s1962
      $region52: #{_conv_bn_jit.2} parent=47 // pred_fallthru
        _
      // Predicated region
      $region53: #{_conv_bn_jit.2} parent=47 // pred_check
        %p1964 = pneg %p144
      $region54: #{_conv_bn_jit.2} parent=47 // pred_check_branch
        %1966 = sbr.rel (%p1964) target = $region56
      $region55: #{_conv_bn_jit.2} parent=47 // pred_region
        %p1967 = scmp.lt.s32.totalorder %s23, 1
        %s1968 = scalar_select %p1967, %s23, 1
        %p1969 = scmp.lt.s32.totalorder %s24, 0
        %s1970 = scalar_select %p1969, %s24, 0
        %s1971 = sadd.s32 %s1970, %s1968
        %s1972 = smul.addr %s1971, 2
        %s1973 = scalar_lea.vmem %s3, %s1972
      $region56: #{_conv_bn_jit.2} parent=47 // pred_fallthru
        _
    $region48: #{_conv_bn_jit.2} parent=5 // pred_fallthru
      _
  $region6: #{_conv_bn_jit.2} parent=0 // loop_footer
    %s14 = sadd.s32 1, %s10
  $region7: #{_conv_bn_jit.2} parent=0 // loop_footer_branch
    %9 = sbr.rel target = $region3
  $region8: #{_conv_bn_jit.2} parent=0 // loop_exit
    _

// kernel: _conv_bn_jit.3
$region0: #{_conv_bn_jit.3}
  #allocation0 [shape = 'u32[]', space=smem, size = 0x4, offset = 0x4, fixed_abs, tag = 'smem constant byte address 0x4 - core index']
  #allocation1 [shape = 'u32[144,128]{1,0:T(1,128)}', space=vmem, size = 0x12000, scoped, tag = 'internal scratch']
  %s0 = inlined_call_operand.vmem [shape: bf16[1024,128], index: 0, kind: input, shape index: {}]
  %s1 = inlined_call_operand.vmem [shape: f32[1,128], index: 1, kind: input, shape index: {}]
  %s2 = inlined_call_operand.vmem [shape: f32[1,128], index: 2, kind: input, shape index: {}]
  %s3 = inlined_call_operand.vmem [shape: bf16[1024,128], index: 3, kind: output, shape index: {}]
  %s4 = sld [smem:[#allocation0]]
  $region45: #{_conv_bn_jit.3} parent=0
    _
  %s6 = ssub.s32 1, %s4
  %s7 = scalar_select 0, %s6, %s4
  loop: start=0, step=1, limit=4
  $region2: #{_conv_bn_jit.3} parent=0 // loop_pre_header
    _
  $region3: #{_conv_bn_jit.3} parent=0 // loop_header
    %s9 = sphi 0, %s13
    %p10 = scmp.ge.s32.totalorder %s9, 4
    %s16 = sphi 0, %s28
    %s17 = sphi 0, %s24
    %s18 = sphi 0, %s16
    %s19 = sphi 0, %s17
    %s20 = sphi 0, %s18
    %s21 = sphi 0, %s19
    %s33 = sphi 0, %s35
    %s36 = sphi 0, %s33
    %s37 = sphi 0, %s36
    %s53 = sphi 0, %s37
    %s59 = sphi 0, %s61
    %s62 = sphi 0, %s59
    %s63 = sphi 0, %s62
    %s79 = sphi 0, %s63
    %s85 = sphi 0, %s87
    %s88 = sphi 0, %s85
    %s89 = sphi 0, %s88
    %s105 = sphi 0, %s89
    %s113 = sphi 0, %s115
    %s116 = sphi 0, %s113
    %s117 = sphi 0, %s116
    %s133 = sphi 0, %s117
  $region4: #{_conv_bn_jit.3} parent=0 // loop_header_branch
    %12 = sbr.rel (%p10) target = $region8
  $region5: #{_conv_bn_jit.3} parent=0 // loop_body
    %s14 = ssub.s32 %s9, 1
    %s15 = ssub.s32 %s9, 2
    %s22 = sadd.s32 1, %s17
    %p23 = scmp.ge.s32.totalorder %s22, 1
    %s24 = scalar_select %p23, 0, %s22
    %s25 = sadd.s32 1, %s16
    %s26 = scalar_select %p23, %s25, %s16
    %p27 = scmp.ge.s32.totalorder %s26, 2
    %s28 = scalar_select %p27, 0, %s26
    %s29 = ssub.s32 %s16, %s28
    %s30 = ssub.s32 %s17, %s24
    %s31 = sor.u32 %s29, %s30
    %p32 = scmp.eq.s32.totalorder %s31, 0
    %s34 = sadd.s32 %s33, 1
    %s35 = scalar_select %p32, %s33, %s34
    %p38 = pneg %p32
    %p39 = scmp.eq.s32.totalorder %s9, 1
    %p40 = por %p38, %p39
    %p41 = scmp.ne.s32.totalorder %s33, %s36
    %p42 = scmp.eq.s32.totalorder %s9, 0
    %p43 = por %p41, %p42
    %p44 = scmp.ne.s32.totalorder %s33, %s36
    %p45 = scmp.eq.s32.totalorder %s14, 1
    %p46 = por %p44, %p45
    %p47 = scmp.ne.s32.totalorder %s36, %s37
    %p48 = scmp.eq.s32.totalorder %s14, 0
    %p49 = por %p47, %p48
    %p50 = scmp.ne.s32.totalorder %s36, %s37
    %p51 = scmp.eq.s32.totalorder %s15, 1
    %p52 = por %p50, %p51
    %p54 = scmp.ne.s32.totalorder %s37, %s53
    %p55 = scmp.eq.s32.totalorder %s15, 0
    %p56 = por %p54, %p55
    %s57 = ssub.s32 %s17, %s24
    %p58 = scmp.eq.s32.totalorder %s57, 0
    %s60 = sadd.s32 %s59, 1
    %s61 = scalar_select %p58, %s59, %s60
    %p64 = pneg %p58
    %p65 = scmp.eq.s32.totalorder %s9, 1
    %p66 = por %p64, %p65
    %p67 = scmp.ne.s32.totalorder %s59, %s62
    %p68 = scmp.eq.s32.totalorder %s9, 0
    %p69 = por %p67, %p68
    %p70 = scmp.ne.s32.totalorder %s59, %s62
    %p71 = scmp.eq.s32.totalorder %s14, 1
    %p72 = por %p70, %p71
    %p73 = scmp.ne.s32.totalorder %s62, %s63
    %p74 = scmp.eq.s32.totalorder %s14, 0
    %p75 = por %p73, %p74
    %p76 = scmp.ne.s32.totalorder %s62, %s63
    %p77 = scmp.eq.s32.totalorder %s15, 1
    %p78 = por %p76, %p77
    %p80 = scmp.ne.s32.totalorder %s63, %s79
    %p81 = scmp.eq.s32.totalorder %s15, 0
    %p82 = por %p80, %p81
    %s83 = ssub.s32 %s17, %s24
    %p84 = scmp.eq.s32.totalorder %s83, 0
    %s86 = sadd.s32 %s85, 1
    %s87 = scalar_select %p84, %s85, %s86
    %p90 = pneg %p84
    %p91 = scmp.eq.s32.totalorder %s9, 1
    %p92 = por %p90, %p91
    %p93 = scmp.ne.s32.totalorder %s85, %s88
    %p94 = scmp.eq.s32.totalorder %s9, 0
    %p95 = por %p93, %p94
    %p96 = scmp.ne.s32.totalorder %s85, %s88
    %p97 = scmp.eq.s32.totalorder %s14, 1
    %p98 = por %p96, %p97
    %p99 = scmp.ne.s32.totalorder %s88, %s89
    %p100 = scmp.eq.s32.totalorder %s14, 0
    %p101 = por %p99, %p100
    %p102 = scmp.ne.s32.totalorder %s88, %s89
    %p103 = scmp.eq.s32.totalorder %s15, 1
    %p104 = por %p102, %p103
    %p106 = scmp.ne.s32.totalorder %s89, %s105
    %p107 = scmp.eq.s32.totalorder %s15, 0
    %p108 = por %p106, %p107
    %s109 = ssub.s32 %s16, %s28
    %s110 = ssub.s32 %s17, %s24
    %s111 = sor.u32 %s109, %s110
    %p112 = scmp.eq.s32.totalorder %s111, 0
    %s114 = sadd.s32 %s113, 1
    %s115 = scalar_select %p112, %s113, %s114
    %p118 = pneg %p112
    %p119 = scmp.eq.s32.totalorder %s9, 1
    %p120 = por %p118, %p119
    %p121 = scmp.ne.s32.totalorder %s113, %s116
    %p122 = scmp.eq.s32.totalorder %s9, 0
    %p123 = por %p121, %p122
    %p124 = scmp.ne.s32.totalorder %s113, %s116
    %p125 = scmp.eq.s32.totalorder %s14, 1
    %p126 = por %p124, %p125
    %p127 = scmp.ne.s32.totalorder %s116, %s117
    %p128 = scmp.eq.s32.totalorder %s14, 0
    %p129 = por %p127, %p128
    %p130 = scmp.ne.s32.totalorder %s116, %s117
    %p131 = scmp.eq.s32.totalorder %s15, 1
    %p132 = por %p130, %p131
    %p134 = scmp.ne.s32.totalorder %s117, %s133
    %p135 = scmp.eq.s32.totalorder %s15, 0
    %p136 = por %p134, %p135
    %p137 = scmp.le.s32.totalorder 1, %s9
    %p138 = scmp.lt.s32.totalorder %s9, 3
    %p139 = pnand %p137, %p138
    %p140 = pneg %p139
    // Predicated region
    $region9: #{_conv_bn_jit.3} parent=5 // pred_check
      _
    $region10: #{_conv_bn_jit.3} parent=5 // pred_check_branch
      %142 = sbr.rel (%p139) target = $region12
    $region11: #{_conv_bn_jit.3} parent=5 // pred_region
      %s143 = ssub.s32 %s9, 1
      // Predicated region
      $region13: #{_conv_bn_jit.3} parent=11 // pred_check
        %p144 = pneg %p75
      $region14: #{_conv_bn_jit.3} parent=11 // pred_check_branch
        %146 = sbr.rel (%p144) target = $region16
      $region15: #{_conv_bn_jit.3} parent=11 // pred_region
        %p147 = scmp.lt.s32.totalorder %s19, 0
        %s148 = scalar_select %p147, %s19, 0
        %s149 = scalar_lea.vmem %s1, %s148
      $region16: #{_conv_bn_jit.3} parent=11 // pred_fallthru
        _
      // Predicated region
      $region17: #{_conv_bn_jit.3} parent=11 // pred_check
        %p150 = pneg %p101
      $region18: #{_conv_bn_jit.3} parent=11 // pred_check_branch
        %152 = sbr.rel (%p150) target = $region20
      $region19: #{_conv_bn_jit.3} parent=11 // pred_region
        %p153 = scmp.lt.s32.totalorder %s19, 0
        %s154 = scalar_select %p153, %s19, 0
        %s155 = scalar_lea.vmem %s2, %s154
      $region20: #{_conv_bn_jit.3} parent=11 // pred_fallthru
        _
    $region12: #{_conv_bn_jit.3} parent=5 // pred_fallthru
      _
    %p156 = scmp.lt.s32.totalorder %s9, 2
    // Predicated region
    $region21: #{_conv_bn_jit.3} parent=5 // pred_check
      %p157 = pneg %p156
    $region22: #{_conv_bn_jit.3} parent=5 // pred_check_branch
      %159 = sbr.rel (%p157) target = $region24
    $region23: #{_conv_bn_jit.3} parent=5 // pred_region
      // Predicated region
      $region25: #{_conv_bn_jit.3} parent=23 // pred_check
        %p160 = pneg %p43
      $region26: #{_conv_bn_jit.3} parent=23 // pred_check_branch
        %162 = sbr.rel (%p160) target = $region28
      $region27: #{_conv_bn_jit.3} parent=23 // pred_region
        %s163 = smul.u32 64, %s16
        %p164 = scmp.lt.s32.totalorder %s163, 127
        %s165 = scalar_select %p164, %s163, 127
        %p166 = scmp.lt.s32.totalorder %s17, 0
        %s167 = scalar_select %p166, %s17, 0
        %s168 = sadd.s32 %s167, %s165
        %s169 = smul.addr %s168, 4
        %s170 = scalar_lea.vmem %s0, %s169
        %s171 = smul.u32 64, %s16
      $region28: #{_conv_bn_jit.3} parent=23 // pred_fallthru
        _
    $region24: #{_conv_bn_jit.3} parent=5 // pred_fallthru
      _
    %p172 = scmp.le.s32.totalorder 1, %s9
    %p173 = scmp.lt.s32.totalorder %s9, 3
    %p174 = pnand %p172, %p173
    %p175 = pneg %p174
    // Predicated region
    $region29: #{_conv_bn_jit.3} parent=5 // pred_check
      _
    $region30: #{_conv_bn_jit.3} parent=5 // pred_check_branch
      %177 = sbr.rel (%p174) target = $region32
    $region31: #{_conv_bn_jit.3} parent=5 // pred_region
      %s178 = ssub.s32 %s9, 1
      %s179 = smul.u32 64, %s18
      %p180 = scmp.lt.s32.totalorder %s179, 127
      %s181 = scalar_select %p180, %s179, 127
      %p182 = scmp.lt.s32.totalorder %s19, 0
      %s183 = scalar_select %p182, %s19, 0
      %s184 = sadd.s32 %s183, %s181
      %s185 = smul.addr %s184, 4
      %s186 = scalar_lea.vmem %s0, %s185
      %p187 = pneg %p49
      %p188 = pneg %p46
      %p189 = scmp.lt.s32.totalorder %s19, 0
      %s190 = scalar_select %p189, %s19, 0
      %s191 = scalar_lea.vmem %s1, %s190
      %p192 = pneg %p75
      %p193 = pneg %p72
      %p194 = scmp.lt.s32.totalorder %s19, 0
      %s195 = scalar_select %p194, %s19, 0
      %s196 = scalar_lea.vmem %s2, %s195
      %p197 = pneg %p101
      %p198 = pneg %p98
      %p199 = pneg %p129
      %p200 = pneg %p126
      %s201 = smul.u32 64, %s18
      %p202 = scmp.lt.s32.totalorder %s201, 127
      %s203 = scalar_select %p202, %s201, 127
      %p204 = scmp.lt.s32.totalorder %s19, 0
      %s205 = scalar_select %p204, %s19, 0
      %s206 = sadd.s32 %s205, %s203
      %s207 = smul.addr %s206, 4
      %s208 = scalar_lea.vmem %s3, %s207
      %s209 = smul.u32 64, %s18
      %p210 = scmp.lt.s32.totalorder %s209, 127
      %s211 = scalar_select %p210, %s209, 127
      %p212 = scmp.lt.s32.totalorder %s19, 0
      %s213 = scalar_select %p212, %s19, 0
      %s214 = sadd.s32 %s213, %s211
      %s215 = smul.addr %s214, 4
      %s216 = scalar_lea.vmem %s0, %s215
      %s217 = smul.u32 64, %s18
      %p218 = scmp.lt.s32.totalorder %s19, 0
      %s219 = scalar_select %p218, %s19, 0
      %s220 = scalar_lea.vmem %s1, %s219
      %p221 = scmp.lt.s32.totalorder %s19, 0
      %s222 = scalar_select %p221, %s19, 0
      %s223 = scalar_lea.vmem %s2, %s222
      %s224 = smul.u32 64, %s18
      %p225 = scmp.lt.s32.totalorder %s224, 127
      %s226 = scalar_select %p225, %s224, 127
      %p227 = scmp.lt.s32.totalorder %s19, 0
      %s228 = scalar_select %p227, %s19, 0
      %s229 = sadd.s32 %s228, %s226
      %s230 = smul.addr %s229, 4
      %s231 = scalar_lea.vmem %s3, %s230
      %s232 = smul.u32 64, %s18
      %v233 = vld [vmem:[%s216] sm:$0xf]
      %v234 = vld [vmem:[%s216 + $0x4] sm:$0xf]
      %v235 = vld [vmem:[%s216 + $0x8] sm:$0xf]
      %v236 = vld [vmem:[%s216 + $0xc] sm:$0xf]
      %v237 = vld [vmem:[%s216 + $0x10] sm:$0xf]
      %v238 = vld [vmem:[%s216 + $0x14] sm:$0xf]
      %v239 = vld [vmem:[%s216 + $0x18] sm:$0xf]
      %v240 = vld [vmem:[%s216 + $0x1c] sm:$0xf]
      %v241 = vld [vmem:[%s216 + $0x20] sm:$0xf]
      %v242 = vld [vmem:[%s216 + $0x24] sm:$0xf]
      %v243 = vld [vmem:[%s216 + $0x28] sm:$0xf]
      %v244 = vld [vmem:[%s216 + $0x2c] sm:$0xf]
      %v245 = vld [vmem:[%s216 + $0x30] sm:$0xf]
      %v246 = vld [vmem:[%s216 + $0x34] sm:$0xf]
      %v247 = vld [vmem:[%s216 + $0x38] sm:$0xf]
      %v248 = vld [vmem:[%s216 + $0x3c] sm:$0xf]
      %v249 = vld [vmem:[%s216 + $0x40] sm:$0xf]
      %v250 = vld [vmem:[%s216 + $0x44] sm:$0xf]
      %v251 = vld [vmem:[%s216 + $0x48] sm:$0xf]
      %v252 = vld [vmem:[%s216 + $0x4c] sm:$0xf]
      %v253 = vld [vmem:[%s216 + $0x50] sm:$0xf]
      %v254 = vld [vmem:[%s216 + $0x54] sm:$0xf]
      %v255 = vld [vmem:[%s216 + $0x58] sm:$0xf]
      %v256 = vld [vmem:[%s216 + $0x5c] sm:$0xf]
      %v257 = vld [vmem:[%s216 + $0x60] sm:$0xf]
      %v258 = vld [vmem:[%s216 + $0x64] sm:$0xf]
      %v259 = vld [vmem:[%s216 + $0x68] sm:$0xf]
      %v260 = vld [vmem:[%s216 + $0x6c] sm:$0xf]
      %v261 = vld [vmem:[%s216 + $0x70] sm:$0xf]
      %v262 = vld [vmem:[%s216 + $0x74] sm:$0xf]
      %v263 = vld [vmem:[%s216 + $0x78] sm:$0xf]
      %v264 = vld [vmem:[%s216 + $0x7c] sm:$0xf]
      %v265 = vld [vmem:[%s216 + $0x80] sm:$0xf]
      %v266 = vld [vmem:[%s216 + $0x84] sm:$0xf]
      %v267 = vld [vmem:[%s216 + $0x88] sm:$0xf]
      %v268 = vld [vmem:[%s216 + $0x8c] sm:$0xf]
      %v269 = vld [vmem:[%s216 + $0x90] sm:$0xf]
      %v270 = vld [vmem:[%s216 + $0x94] sm:$0xf]
      %v271 = vld [vmem:[%s216 + $0x98] sm:$0xf]
      %v272 = vld [vmem:[%s216 + $0x9c] sm:$0xf]
      %v273 = vld [vmem:[%s216 + $0xa0] sm:$0xf]
      %v274 = vld [vmem:[%s216 + $0xa4] sm:$0xf]
      %v275 = vld [vmem:[%s216 + $0xa8] sm:$0xf]
      %v276 = vld [vmem:[%s216 + $0xac] sm:$0xf]
      %v277 = vld [vmem:[%s216 + $0xb0] sm:$0xf]
      %v278 = vld [vmem:[%s216 + $0xb4] sm:$0xf]
      %v279 = vld [vmem:[%s216 + $0xb8] sm:$0xf]
      %v280 = vld [vmem:[%s216 + $0xbc] sm:$0xf]
      %v281 = vld [vmem:[%s216 + $0xc0] sm:$0xf]
      %v282 = vld [vmem:[%s216 + $0xc4] sm:$0xf]
      %v283 = vld [vmem:[%s216 + $0xc8] sm:$0xf]
      %v284 = vld [vmem:[%s216 + $0xcc] sm:$0xf]
      %v285 = vld [vmem:[%s216 + $0xd0] sm:$0xf]
      %v286 = vld [vmem:[%s216 + $0xd4] sm:$0xf]
      %v287 = vld [vmem:[%s216 + $0xd8] sm:$0xf]
      %v288 = vld [vmem:[%s216 + $0xdc] sm:$0xf]
      %v289 = vld [vmem:[%s216 + $0xe0] sm:$0xf]
      %v290 = vld [vmem:[%s216 + $0xe4] sm:$0xf]
      %v291 = vld [vmem:[%s216 + $0xe8] sm:$0xf]
      %v292 = vld [vmem:[%s216 + $0xec] sm:$0xf]
      %v293 = vld [vmem:[%s216 + $0xf0] sm:$0xf]
      %v294 = vld [vmem:[%s216 + $0xf4] sm:$0xf]
      %v295 = vld [vmem:[%s216 + $0xf8] sm:$0xf]
      %v296 = vld [vmem:[%s216 + $0xfc] sm:$0xf]
      %v297 = vunpack.c.l.bf16 %v233
      %v298 = vunpack.c.l.bf16 %v234
      %v299 = vunpack.c.l.bf16 %v235
      %v300 = vunpack.c.l.bf16 %v236
      %v301 = vunpack.c.l.bf16 %v237
      %v302 = vunpack.c.l.bf16 %v238
      %v303 = vunpack.c.l.bf16 %v239
      %v304 = vunpack.c.l.bf16 %v240
      %v305 = vunpack.c.l.bf16 %v241
      %v306 = vunpack.c.l.bf16 %v242
      %v307 = vunpack.c.l.bf16 %v243
      %v308 = vunpack.c.l.bf16 %v244
      %v309 = vunpack.c.l.bf16 %v245
      %v310 = vunpack.c.l.bf16 %v246
      %v311 = vunpack.c.l.bf16 %v247
      %v312 = vunpack.c.l.bf16 %v248
      %v313 = vunpack.c.l.bf16 %v249
      %v314 = vunpack.c.l.bf16 %v250
      %v315 = vunpack.c.l.bf16 %v251
      %v316 = vunpack.c.l.bf16 %v252
      %v317 = vunpack.c.l.bf16 %v253
      %v318 = vunpack.c.l.bf16 %v254
      %v319 = vunpack.c.l.bf16 %v255
      %v320 = vunpack.c.l.bf16 %v256
      %v321 = vunpack.c.l.bf16 %v257
      %v322 = vunpack.c.l.bf16 %v258
      %v323 = vunpack.c.l.bf16 %v259
      %v324 = vunpack.c.l.bf16 %v260
      %v325 = vunpack.c.l.bf16 %v261
      %v326 = vunpack.c.l.bf16 %v262
      %v327 = vunpack.c.l.bf16 %v263
      %v328 = vunpack.c.l.bf16 %v264
      %v329 = vunpack.c.l.bf16 %v265
      %v330 = vunpack.c.l.bf16 %v266
      %v331 = vunpack.c.l.bf16 %v267
      %v332 = vunpack.c.l.bf16 %v268
      %v333 = vunpack.c.l.bf16 %v269
      %v334 = vunpack.c.l.bf16 %v270
      %v335 = vunpack.c.l.bf16 %v271
      %v336 = vunpack.c.l.bf16 %v272
      %v337 = vunpack.c.l.bf16 %v273
      %v338 = vunpack.c.l.bf16 %v274
      %v339 = vunpack.c.l.bf16 %v275
      %v340 = vunpack.c.l.bf16 %v276
      %v341 = vunpack.c.l.bf16 %v277
      %v342 = vunpack.c.l.bf16 %v278
      %v343 = vunpack.c.l.bf16 %v279
      %v344 = vunpack.c.l.bf16 %v280
      %v345 = vunpack.c.l.bf16 %v281
      %v346 = vunpack.c.l.bf16 %v282
      %v347 = vunpack.c.l.bf16 %v283
      %v348 = vunpack.c.l.bf16 %v284
      %v349 = vunpack.c.l.bf16 %v285
      %v350 = vunpack.c.l.bf16 %v286
      %v351 = vunpack.c.l.bf16 %v287
      %v352 = vunpack.c.l.bf16 %v288
      %v353 = vunpack.c.l.bf16 %v289
      %v354 = vunpack.c.l.bf16 %v290
      %v355 = vunpack.c.l.bf16 %v291
      %v356 = vunpack.c.l.bf16 %v292
      %v357 = vunpack.c.l.bf16 %v293
      %v358 = vunpack.c.l.bf16 %v294
      %v359 = vunpack.c.l.bf16 %v295
      %v360 = vunpack.c.l.bf16 %v296
      %v361 = vld [vmem:[%s220] sm:$0x1]
      %v363 = vlaneseq
      %v364 = vshrl.u32 %v363, 7
      %v365 = vsub.s32 0, %v364
      %v366 = vrot.slane %v361, %v365
      %v368 = vmul.f32 %v297, %v366
      %v369 = vmul.f32 %v298, %v366
      %v370 = vmul.f32 %v299, %v366
      %v371 = vmul.f32 %v300, %v366
      %v372 = vmul.f32 %v301, %v366
      %v373 = vmul.f32 %v302, %v366
      %v374 = vmul.f32 %v303, %v366
      %v375 = vmul.f32 %v304, %v366
      %v376 = vmul.f32 %v305, %v366
      %v377 = vmul.f32 %v306, %v366
      %v378 = vmul.f32 %v307, %v366
      %v379 = vmul.f32 %v308, %v366
      %v380 = vmul.f32 %v309, %v366
      %v381 = vmul.f32 %v310, %v366
      %v382 = vmul.f32 %v311, %v366
      %v383 = vmul.f32 %v312, %v366
      %v384 = vmul.f32 %v313, %v366
      %v385 = vmul.f32 %v314, %v366
      %v386 = vmul.f32 %v315, %v366
      %v387 = vmul.f32 %v316, %v366
      %v388 = vmul.f32 %v317, %v366
      %v389 = vmul.f32 %v318, %v366
      %v390 = vmul.f32 %v319, %v366
      %v391 = vmul.f32 %v320, %v366
      %v392 = vmul.f32 %v321, %v366
      %v393 = vmul.f32 %v322, %v366
      %v394 = vmul.f32 %v323, %v366
      %v395 = vmul.f32 %v324, %v366
      %v396 = vmul.f32 %v325, %v366
      %v397 = vmul.f32 %v326, %v366
      %v398 = vmul.f32 %v327, %v366
      %v399 = vmul.f32 %v328, %v366
      %v400 = vmul.f32 %v329, %v366
      %v401 = vmul.f32 %v330, %v366
      %v402 = vmul.f32 %v331, %v366
      %v403 = vmul.f32 %v332, %v366
      %v404 = vmul.f32 %v333, %v366
      %v405 = vmul.f32 %v334, %v366
      %v406 = vmul.f32 %v335, %v366
      %v407 = vmul.f32 %v336, %v366
      %v408 = vmul.f32 %v337, %v366
      %v409 = vmul.f32 %v338, %v366
      %v410 = vmul.f32 %v339, %v366
      %v411 = vmul.f32 %v340, %v366
      %v412 = vmul.f32 %v341, %v366
      %v413 = vmul.f32 %v342, %v366
      %v414 = vmul.f32 %v343, %v366
      %v415 = vmul.f32 %v344, %v366
      %v416 = vmul.f32 %v345, %v366
      %v417 = vmul.f32 %v346, %v366
      %v418 = vmul.f32 %v347, %v366
      %v419 = vmul.f32 %v348, %v366
      %v420 = vmul.f32 %v349, %v366
      %v421 = vmul.f32 %v350, %v366
      %v422 = vmul.f32 %v351, %v366
      %v423 = vmul.f32 %v352, %v366
      %v424 = vmul.f32 %v353, %v366
      %v425 = vmul.f32 %v354, %v366
      %v426 = vmul.f32 %v355, %v366
      %v427 = vmul.f32 %v356, %v366
      %v428 = vmul.f32 %v357, %v366
      %v429 = vmul.f32 %v358, %v366
      %v430 = vmul.f32 %v359, %v366
      %v431 = vmul.f32 %v360, %v366
      %v432 = vld [vmem:[%s223] sm:$0x1]
      %v434 = vlaneseq
      %v435 = vshrl.u32 %v434, 7
      %v436 = vsub.s32 0, %v435
      %v437 = vrot.slane %v432, %v436
      %v439 = vadd.f32 %v368, %v437
      %v440 = vadd.f32 %v369, %v437
      %v441 = vadd.f32 %v370, %v437
      %v442 = vadd.f32 %v371, %v437
      %v443 = vadd.f32 %v372, %v437
      %v444 = vadd.f32 %v373, %v437
      %v445 = vadd.f32 %v374, %v437
      %v446 = vadd.f32 %v375, %v437
      %v447 = vadd.f32 %v376, %v437
      %v448 = vadd.f32 %v377, %v437
      %v449 = vadd.f32 %v378, %v437
      %v450 = vadd.f32 %v379, %v437
      %v451 = vadd.f32 %v380, %v437
      %v452 = vadd.f32 %v381, %v437
      %v453 = vadd.f32 %v382, %v437
      %v454 = vadd.f32 %v383, %v437
      %v455 = vadd.f32 %v384, %v437
      %v456 = vadd.f32 %v385, %v437
      %v457 = vadd.f32 %v386, %v437
      %v458 = vadd.f32 %v387, %v437
      %v459 = vadd.f32 %v388, %v437
      %v460 = vadd.f32 %v389, %v437
      %v461 = vadd.f32 %v390, %v437
      %v462 = vadd.f32 %v391, %v437
      %v463 = vadd.f32 %v392, %v437
      %v464 = vadd.f32 %v393, %v437
      %v465 = vadd.f32 %v394, %v437
      %v466 = vadd.f32 %v395, %v437
      %v467 = vadd.f32 %v396, %v437
      %v468 = vadd.f32 %v397, %v437
      %v469 = vadd.f32 %v398, %v437
      %v470 = vadd.f32 %v399, %v437
      %v471 = vadd.f32 %v400, %v437
      %v472 = vadd.f32 %v401, %v437
      %v473 = vadd.f32 %v402, %v437
      %v474 = vadd.f32 %v403, %v437
      %v475 = vadd.f32 %v404, %v437
      %v476 = vadd.f32 %v405, %v437
      %v477 = vadd.f32 %v406, %v437
      %v478 = vadd.f32 %v407, %v437
      %v479 = vadd.f32 %v408, %v437
      %v480 = vadd.f32 %v409, %v437
      %v481 = vadd.f32 %v410, %v437
      %v482 = vadd.f32 %v411, %v437
      %v483 = vadd.f32 %v412, %v437
      %v484 = vadd.f32 %v413, %v437
      %v485 = vadd.f32 %v414, %v437
      %v486 = vadd.f32 %v415, %v437
      %v487 = vadd.f32 %v416, %v437
      %v488 = vadd.f32 %v417, %v437
      %v489 = vadd.f32 %v418, %v437
      %v490 = vadd.f32 %v419, %v437
      %v491 = vadd.f32 %v420, %v437
      %v492 = vadd.f32 %v421, %v437
      %v493 = vadd.f32 %v422, %v437
      %v494 = vadd.f32 %v423, %v437
      %v495 = vadd.f32 %v424, %v437
      %v496 = vadd.f32 %v425, %v437
      %v497 = vadd.f32 %v426, %v437
      %v498 = vadd.f32 %v427, %v437
      %v499 = vadd.f32 %v428, %v437
      %v500 = vadd.f32 %v429, %v437
      %v501 = vadd.f32 %v430, %v437
      %v502 = vadd.f32 %v431, %v437
      %v503 = vmax.f32 %v439, 0.0
      %v504 = vmax.f32 %v440, 0.0
      %v505 = vmax.f32 %v441, 0.0
      %v506 = vmax.f32 %v442, 0.0
      %v507 = vmax.f32 %v443, 0.0
      %v508 = vmax.f32 %v444, 0.0
      %v509 = vmax.f32 %v445, 0.0
      %v510 = vmax.f32 %v446, 0.0
      %v511 = vmax.f32 %v447, 0.0
      %v512 = vmax.f32 %v448, 0.0
      %v513 = vmax.f32 %v449, 0.0
      %v514 = vmax.f32 %v450, 0.0
      %v515 = vmax.f32 %v451, 0.0
      %v516 = vmax.f32 %v452, 0.0
      %v517 = vmax.f32 %v453, 0.0
      %v518 = vmax.f32 %v454, 0.0
      %v519 = vmax.f32 %v455, 0.0
      %v520 = vmax.f32 %v456, 0.0
      %v521 = vmax.f32 %v457, 0.0
      %v522 = vmax.f32 %v458, 0.0
      %v523 = vmax.f32 %v459, 0.0
      %v524 = vmax.f32 %v460, 0.0
      %v525 = vmax.f32 %v461, 0.0
      %v526 = vmax.f32 %v462, 0.0
      %v527 = vmax.f32 %v463, 0.0
      %v528 = vmax.f32 %v464, 0.0
      %v529 = vmax.f32 %v465, 0.0
      %v530 = vmax.f32 %v466, 0.0
      %v531 = vmax.f32 %v467, 0.0
      %v532 = vmax.f32 %v468, 0.0
      %v533 = vmax.f32 %v469, 0.0
      %v534 = vmax.f32 %v470, 0.0
      %v535 = vmax.f32 %v471, 0.0
      %v536 = vmax.f32 %v472, 0.0
      %v537 = vmax.f32 %v473, 0.0
      %v538 = vmax.f32 %v474, 0.0
      %v539 = vmax.f32 %v475, 0.0
      %v540 = vmax.f32 %v476, 0.0
      %v541 = vmax.f32 %v477, 0.0
      %v542 = vmax.f32 %v478, 0.0
      %v543 = vmax.f32 %v479, 0.0
      %v544 = vmax.f32 %v480, 0.0
      %v545 = vmax.f32 %v481, 0.0
      %v546 = vmax.f32 %v482, 0.0
      %v547 = vmax.f32 %v483, 0.0
      %v548 = vmax.f32 %v484, 0.0
      %v549 = vmax.f32 %v485, 0.0
      %v550 = vmax.f32 %v486, 0.0
      %v551 = vmax.f32 %v487, 0.0
      %v552 = vmax.f32 %v488, 0.0
      %v553 = vmax.f32 %v489, 0.0
      %v554 = vmax.f32 %v490, 0.0
      %v555 = vmax.f32 %v491, 0.0
      %v556 = vmax.f32 %v492, 0.0
      %v557 = vmax.f32 %v493, 0.0
      %v558 = vmax.f32 %v494, 0.0
      %v559 = vmax.f32 %v495, 0.0
      %v560 = vmax.f32 %v496, 0.0
      %v561 = vmax.f32 %v497, 0.0
      %v562 = vmax.f32 %v498, 0.0
      %v563 = vmax.f32 %v499, 0.0
      %v564 = vmax.f32 %v500, 0.0
      %v565 = vmax.f32 %v501, 0.0
      %v566 = vmax.f32 %v502, 0.0
      %v567 = vpack.c.bf16 %v504, %v503
      %v568 = vpack.c.bf16 %v506, %v505
      %v569 = vpack.c.bf16 %v508, %v507
      %v570 = vpack.c.bf16 %v510, %v509
      %v571 = vpack.c.bf16 %v512, %v511
      %v572 = vpack.c.bf16 %v514, %v513
      %v573 = vpack.c.bf16 %v516, %v515
      %v574 = vpack.c.bf16 %v518, %v517
      %v575 = vpack.c.bf16 %v520, %v519
      %v576 = vpack.c.bf16 %v522, %v521
      %v577 = vpack.c.bf16 %v524, %v523
      %v578 = vpack.c.bf16 %v526, %v525
      %v579 = vpack.c.bf16 %v528, %v527
      %v580 = vpack.c.bf16 %v530, %v529
      %v581 = vpack.c.bf16 %v532, %v531
      %v582 = vpack.c.bf16 %v534, %v533
      %v583 = vpack.c.bf16 %v536, %v535
      %v584 = vpack.c.bf16 %v538, %v537
      %v585 = vpack.c.bf16 %v540, %v539
      %v586 = vpack.c.bf16 %v542, %v541
      %v587 = vpack.c.bf16 %v544, %v543
      %v588 = vpack.c.bf16 %v546, %v545
      %v589 = vpack.c.bf16 %v548, %v547
      %v590 = vpack.c.bf16 %v550, %v549
      %v591 = vpack.c.bf16 %v552, %v551
      %v592 = vpack.c.bf16 %v554, %v553
      %v593 = vpack.c.bf16 %v556, %v555
      %v594 = vpack.c.bf16 %v558, %v557
      %v595 = vpack.c.bf16 %v560, %v559
      %v596 = vpack.c.bf16 %v562, %v561
      %v597 = vpack.c.bf16 %v564, %v563
      %v598 = vpack.c.bf16 %v566, %v565
      %v631 = vunpack.c.l.b16 %v567
      %v632 = vunpack.c.h.b16 %v567
      %v633 = vunpack.c.l.b16 %v568
      %v634 = vunpack.c.h.b16 %v568
      %v635 = vunpack.c.l.b16 %v569
      %v636 = vunpack.c.h.b16 %v569
      %v637 = vunpack.c.l.b16 %v570
      %v638 = vunpack.c.h.b16 %v570
      %v639 = vunpack.c.l.b16 %v571
      %v640 = vunpack.c.h.b16 %v571
      %v641 = vunpack.c.l.b16 %v572
      %v642 = vunpack.c.h.b16 %v572
      %v643 = vunpack.c.l.b16 %v573
      %v644 = vunpack.c.h.b16 %v573
      %v645 = vunpack.c.l.b16 %v574
      %v646 = vunpack.c.h.b16 %v574
      %v647 = vunpack.c.l.b16 %v575
      %v648 = vunpack.c.h.b16 %v575
      %v649 = vunpack.c.l.b16 %v576
      %v650 = vunpack.c.h.b16 %v576
      %v651 = vunpack.c.l.b16 %v577
      %v652 = vunpack.c.h.b16 %v577
      %v653 = vunpack.c.l.b16 %v578
      %v654 = vunpack.c.h.b16 %v578
      %v655 = vunpack.c.l.b16 %v579
      %v656 = vunpack.c.h.b16 %v579
      %v657 = vunpack.c.l.b16 %v580
      %v658 = vunpack.c.h.b16 %v580
      %v659 = vunpack.c.l.b16 %v581
      %v660 = vunpack.c.h.b16 %v581
      %v661 = vunpack.c.l.b16 %v582
      %v662 = vunpack.c.h.b16 %v582
      %v663 = vunpack.c.l.b16 %v583
      %v664 = vunpack.c.h.b16 %v583
      %v665 = vunpack.c.l.b16 %v584
      %v666 = vunpack.c.h.b16 %v584
      %v667 = vunpack.c.l.b16 %v585
      %v668 = vunpack.c.h.b16 %v585
      %v669 = vunpack.c.l.b16 %v586
      %v670 = vunpack.c.h.b16 %v586
      %v671 = vunpack.c.l.b16 %v587
      %v672 = vunpack.c.h.b16 %v587
      %v673 = vunpack.c.l.b16 %v588
      %v674 = vunpack.c.h.b16 %v588
      %v675 = vunpack.c.l.b16 %v589
      %v676 = vunpack.c.h.b16 %v589
      %v677 = vunpack.c.l.b16 %v590
      %v678 = vunpack.c.h.b16 %v590
      %v679 = vunpack.c.l.b16 %v591
      %v680 = vunpack.c.h.b16 %v591
      %v681 = vunpack.c.l.b16 %v592
      %v682 = vunpack.c.h.b16 %v592
      %v683 = vunpack.c.l.b16 %v593
      %v684 = vunpack.c.h.b16 %v593
      %v685 = vunpack.c.l.b16 %v594
      %v686 = vunpack.c.h.b16 %v594
      %v687 = vunpack.c.l.b16 %v595
      %v688 = vunpack.c.h.b16 %v595
      %v689 = vunpack.c.l.b16 %v596
      %v690 = vunpack.c.h.b16 %v596
      %v691 = vunpack.c.l.b16 %v597
      %v692 = vunpack.c.h.b16 %v597
      %v693 = vunpack.c.l.b16 %v598
      %v694 = vunpack.c.h.b16 %v598
      %v695 = vpack.c.b16 %v631, %v631
      %v696 = vpack.c.b16 %v632, %v632
      %v697 = vpack.c.b16 %v633, %v633
      %v698 = vpack.c.b16 %v634, %v634
      %v699 = vpack.c.b16 %v635, %v635
      %v700 = vpack.c.b16 %v636, %v636
      %v701 = vpack.c.b16 %v637, %v637
      %v702 = vpack.c.b16 %v638, %v638
      %v703 = vpack.c.b16 %v639, %v639
      %v704 = vpack.c.b16 %v640, %v640
      %v705 = vpack.c.b16 %v641, %v641
      %v706 = vpack.c.b16 %v642, %v642
      %v707 = vpack.c.b16 %v643, %v643
      %v708 = vpack.c.b16 %v644, %v644
      %v709 = vpack.c.b16 %v645, %v645
      %v710 = vpack.c.b16 %v646, %v646
      %v711 = vpack.c.b16 %v647, %v647
      %v712 = vpack.c.b16 %v648, %v648
      %v713 = vpack.c.b16 %v649, %v649
      %v714 = vpack.c.b16 %v650, %v650
      %v715 = vpack.c.b16 %v651, %v651
      %v716 = vpack.c.b16 %v652, %v652
      %v717 = vpack.c.b16 %v653, %v653
      %v718 = vpack.c.b16 %v654, %v654
      %v719 = vpack.c.b16 %v655, %v655
      %v720 = vpack.c.b16 %v656, %v656
      %v721 = vpack.c.b16 %v657, %v657
      %v722 = vpack.c.b16 %v658, %v658
      %v723 = vpack.c.b16 %v659, %v659
      %v724 = vpack.c.b16 %v660, %v660
      %v725 = vpack.c.b16 %v661, %v661
      %v726 = vpack.c.b16 %v662, %v662
      %v727 = vpack.c.b16 %v663, %v663
      %v728 = vpack.c.b16 %v664, %v664
      %v729 = vpack.c.b16 %v665, %v665
      %v730 = vpack.c.b16 %v666, %v666
      %v731 = vpack.c.b16 %v667, %v667
      %v732 = vpack.c.b16 %v668, %v668
      %v733 = vpack.c.b16 %v669, %v669
      %v734 = vpack.c.b16 %v670, %v670
      %v735 = vpack.c.b16 %v671, %v671
      %v736 = vpack.c.b16 %v672, %v672
      %v737 = vpack.c.b16 %v673, %v673
      %v738 = vpack.c.b16 %v674, %v674
      %v739 = vpack.c.b16 %v675, %v675
      %v740 = vpack.c.b16 %v676, %v676
      %v741 = vpack.c.b16 %v677, %v677
      %v742 = vpack.c.b16 %v678, %v678
      %v743 = vpack.c.b16 %v679, %v679
      %v744 = vpack.c.b16 %v680, %v680
      %v745 = vpack.c.b16 %v681, %v681
      %v746 = vpack.c.b16 %v682, %v682
      %v747 = vpack.c.b16 %v683, %v683
      %v748 = vpack.c.b16 %v684, %v684
      %v749 = vpack.c.b16 %v685, %v685
      %v750 = vpack.c.b16 %v686, %v686
      %v751 = vpack.c.b16 %v687, %v687
      %v752 = vpack.c.b16 %v688, %v688
      %v753 = vpack.c.b16 %v689, %v689
      %v754 = vpack.c.b16 %v690, %v690
      %v755 = vpack.c.b16 %v691, %v691
      %v756 = vpack.c.b16 %v692, %v692
      %v757 = vpack.c.b16 %v693, %v693
      %v758 = vpack.c.b16 %v694, %v694
      %823 = vst [vmem:[%s231] sm:$0xf] %v695
      %824 = vst [vmem:[%s231 + $0x4] sm:$0xf] %v696
      %825 = vst [vmem:[%s231 + $0x8] sm:$0xf] %v697
      %826 = vst [vmem:[%s231 + $0xc] sm:$0xf] %v698
      %827 = vst [vmem:[%s231 + $0x10] sm:$0xf] %v699
      %828 = vst [vmem:[%s231 + $0x14] sm:$0xf] %v700
      %829 = vst [vmem:[%s231 + $0x18] sm:$0xf] %v701
      %830 = vst [vmem:[%s231 + $0x1c] sm:$0xf] %v702
      %831 = vst [vmem:[%s231 + $0x20] sm:$0xf] %v703
      %832 = vst [vmem:[%s231 + $0x24] sm:$0xf] %v704
      %833 = vst [vmem:[%s231 + $0x28] sm:$0xf] %v705
      %834 = vst [vmem:[%s231 + $0x2c] sm:$0xf] %v706
      %835 = vst [vmem:[%s231 + $0x30] sm:$0xf] %v707
      %836 = vst [vmem:[%s231 + $0x34] sm:$0xf] %v708
      %837 = vst [vmem:[%s231 + $0x38] sm:$0xf] %v709
      %838 = vst [vmem:[%s231 + $0x3c] sm:$0xf] %v710
      %839 = vst [vmem:[%s231 + $0x40] sm:$0xf] %v711
      %840 = vst [vmem:[%s231 + $0x44] sm:$0xf] %v712
      %841 = vst [vmem:[%s231 + $0x48] sm:$0xf] %v713
      %842 = vst [vmem:[%s231 + $0x4c] sm:$0xf] %v714
      %843 = vst [vmem:[%s231 + $0x50] sm:$0xf] %v715
      %844 = vst [vmem:[%s231 + $0x54] sm:$0xf] %v716
      %845 = vst [vmem:[%s231 + $0x58] sm:$0xf] %v717
      %846 = vst [vmem:[%s231 + $0x5c] sm:$0xf] %v718
      %847 = vst [vmem:[%s231 + $0x60] sm:$0xf] %v719
      %848 = vst [vmem:[%s231 + $0x64] sm:$0xf] %v720
      %849 = vst [vmem:[%s231 + $0x68] sm:$0xf] %v721
      %850 = vst [vmem:[%s231 + $0x6c] sm:$0xf] %v722
      %851 = vst [vmem:[%s231 + $0x70] sm:$0xf] %v723
      %852 = vst [vmem:[%s231 + $0x74] sm:$0xf] %v724
      %853 = vst [vmem:[%s231 + $0x78] sm:$0xf] %v725
      %854 = vst [vmem:[%s231 + $0x7c] sm:$0xf] %v726
      %855 = vst [vmem:[%s231 + $0x80] sm:$0xf] %v727
      %856 = vst [vmem:[%s231 + $0x84] sm:$0xf] %v728
      %857 = vst [vmem:[%s231 + $0x88] sm:$0xf] %v729
      %858 = vst [vmem:[%s231 + $0x8c] sm:$0xf] %v730
      %859 = vst [vmem:[%s231 + $0x90] sm:$0xf] %v731
      %860 = vst [vmem:[%s231 + $0x94] sm:$0xf] %v732
      %861 = vst [vmem:[%s231 + $0x98] sm:$0xf] %v733
      %862 = vst [vmem:[%s231 + $0x9c] sm:$0xf] %v734
      %863 = vst [vmem:[%s231 + $0xa0] sm:$0xf] %v735
      %864 = vst [vmem:[%s231 + $0xa4] sm:$0xf] %v736
      %865 = vst [vmem:[%s231 + $0xa8] sm:$0xf] %v737
      %866 = vst [vmem:[%s231 + $0xac] sm:$0xf] %v738
      %867 = vst [vmem:[%s231 + $0xb0] sm:$0xf] %v739
      %868 = vst [vmem:[%s231 + $0xb4] sm:$0xf] %v740
      %869 = vst [vmem:[%s231 + $0xb8] sm:$0xf] %v741
      %870 = vst [vmem:[%s231 + $0xbc] sm:$0xf] %v742
      %871 = vst [vmem:[%s231 + $0xc0] sm:$0xf] %v743
      %872 = vst [vmem:[%s231 + $0xc4] sm:$0xf] %v744
      %873 = vst [vmem:[%s231 + $0xc8] sm:$0xf] %v745
      %874 = vst [vmem:[%s231 + $0xcc] sm:$0xf] %v746
      %875 = vst [vmem:[%s231 + $0xd0] sm:$0xf] %v747
      %876 = vst [vmem:[%s231 + $0xd4] sm:$0xf] %v748
      %877 = vst [vmem:[%s231 + $0xd8] sm:$0xf] %v749
      %878 = vst [vmem:[%s231 + $0xdc] sm:$0xf] %v750
      %879 = vst [vmem:[%s231 + $0xe0] sm:$0xf] %v751
      %880 = vst [vmem:[%s231 + $0xe4] sm:$0xf] %v752
      %881 = vst [vmem:[%s231 + $0xe8] sm:$0xf] %v753
      %882 = vst [vmem:[%s231 + $0xec] sm:$0xf] %v754
      %883 = vst [vmem:[%s231 + $0xf0] sm:$0xf] %v755
      %884 = vst [vmem:[%s231 + $0xf4] sm:$0xf] %v756
      %885 = vst [vmem:[%s231 + $0xf8] sm:$0xf] %v757
      %886 = vst [vmem:[%s231 + $0xfc] sm:$0xf] %v758
      %s887 = smul.u32 64, %s18
      %p888 = scmp.lt.s32.totalorder %s887, 127
      %s889 = scalar_select %p888, %s887, 127
      %p890 = scmp.lt.s32.totalorder %s19, 0
      %s891 = scalar_select %p890, %s19, 0
      %s892 = sadd.s32 %s891, %s889
      %s893 = smul.addr %s892, 4
      %s894 = scalar_lea.vmem %s3, %s893
      // Predicated region
      $region33: #{_conv_bn_jit.3} parent=31 // pred_check
        %p895 = pneg %p126
      $region34: #{_conv_bn_jit.3} parent=31 // pred_check_branch
        %897 = sbr.rel (%p895) target = $region36
      $region35: #{_conv_bn_jit.3} parent=31 // pred_region
        %s898 = smul.u32 64, %s18
      $region36: #{_conv_bn_jit.3} parent=31 // pred_fallthru
        _
    $region32: #{_conv_bn_jit.3} parent=5 // pred_fallthru
      _
    %p899 = scmp.le.s32.totalorder 2, %s9
    // Predicated region
    $region37: #{_conv_bn_jit.3} parent=5 // pred_check
      %p900 = pneg %p899
    $region38: #{_conv_bn_jit.3} parent=5 // pred_check_branch
      %902 = sbr.rel (%p900) target = $region40
    $region39: #{_conv_bn_jit.3} parent=5 // pred_region
      %s903 = ssub.s32 %s9, 2
      // Predicated region
      $region41: #{_conv_bn_jit.3} parent=39 // pred_check
        %p904 = pneg %p132
      $region42: #{_conv_bn_jit.3} parent=39 // pred_check_branch
        %906 = sbr.rel (%p904) target = $region44
      $region43: #{_conv_bn_jit.3} parent=39 // pred_region
        %s907 = smul.u32 64, %s20
        %p908 = scmp.lt.s32.totalorder %s907, 127
        %s909 = scalar_select %p908, %s907, 127
        %p910 = scmp.lt.s32.totalorder %s21, 0
        %s911 = scalar_select %p910, %s21, 0
        %s912 = sadd.s32 %s911, %s909
        %s913 = smul.addr %s912, 4
        %s914 = scalar_lea.vmem %s3, %s913
      $region44: #{_conv_bn_jit.3} parent=39 // pred_fallthru
        _
    $region40: #{_conv_bn_jit.3} parent=5 // pred_fallthru
      _
  $region6: #{_conv_bn_jit.3} parent=0 // loop_footer
    %s13 = sadd.s32 1, %s9
  $region7: #{_conv_bn_jit.3} parent=0 // loop_footer_branch
    %8 = sbr.rel target = $region3
  $region8: #{_conv_bn_jit.3} parent=0 // loop_exit
    _

</llo_original>
